<compile_context>
chip_gen: v7x
topology: tpu7x:2x2x1
jax: 0.10.0
libtpu: 0.0.40
codegen_flags: <defaults>
</compile_context>

<pallas_src>
import jax
import jax.numpy as jnp
from jax import lax
from jax.experimental import pallas as pl
from jax.experimental.pallas import tpu as pltpu

KH = KW = 3        # 3x3 conv, padding=1, stride=1 (the transform's hot path)
LANES = 128        # vreg lane width; lane-dense channel target
_MIB = 1024 * 1024


def _round_up(n, m):
    return ((n + m - 1) // m) * m


def _pick_row_tile(h, target):
    """Largest divisor of h that is <= target, preferring multiples of 8."""
    if h <= target:
        return h
    divs = [d for d in range(1, target + 1) if h % d == 0]
    mult8 = [d for d in divs if d % 8 == 0]
    return (mult8 or divs)[-1]


def _vmem_capacity_bytes():
    """Trace-time VMEM capacity query; conservative (v7x-sized) fallback."""
    try:
        return int(pltpu.get_tpu_info().vmem_capacity_bytes)
    except Exception:
        return 64 * _MIB


def _conv2d_kernel(top_ref, mid_ref, bot_ref, w_ref, b_ref, o_ref):
    """3x3 conv (pad=1) for one (batch, row-tile) grid cell.

    top_ref: [1, 1, W, Cip]    row r0-1 (clamped at 0; zeroed in-kernel at t==0)
    mid_ref: [1, TH, W, Cip]   rows r0 .. r0+TH-1 of this tile (bf16)
    bot_ref: [1, 1, W, Cip]    row r0+TH (clamped at H-1; zeroed at last tile)
    w_ref:   [KH, KW*Cip, Cout] folded conv weight (bf16), kw/ci fused per kh tap
    b_ref:   [1, Cout]          bias (f32)
    o_ref:   [1, TH, W, Cout]   output row tile
    """
    TH, W, C = mid_ref.shape[1], mid_ref.shape[2], mid_ref.shape[3]
    Cout = o_ref.shape[3]

    t = pl.program_id(1)
    n_t = pl.num_programs(1)

    # H-boundary handling: the halo rows arrive already clamped by their index
    # maps; zero them here to reproduce Conv2d's zero padding (no HBM pad pass).
    top = jnp.where(t > 0, top_ref[0], jnp.zeros_like(top_ref[0]))
    bot = jnp.where(t + 1 < n_t, bot_ref[0], jnp.zeros_like(bot_ref[0]))
    slab = jnp.concatenate([top, mid_ref[0], bot], axis=0)        # [TH+2, W, C]

    # W-shifted copies (zero fill at the W boundary): taps kw = 0, 1, 2.
    # TODO(synk): move these off-by-one sublane shifts to pltpu.roll(axis=1)
    # + a one-column mask to shift the work from the ld/st slots to the XLU.
    zcol = jnp.zeros((TH + 2, 1, C), slab.dtype)
    sh_l = jnp.concatenate([zcol, slab[:, : W - 1, :]], axis=1)   # x[.., w-1, :]
    sh_r = jnp.concatenate([slab[:, 1:, :], zcol], axis=1)        # x[.., w+1, :]

    # kw-fused im2col slab, built ONCE per grid step (K = 3*C).  The concat is
    # 128-lane aligned whenever C % 128 == 0 (always at real GridFeatures sizes).
    slab_kw = jnp.concatenate([sh_l, slab, sh_r], axis=-1)        # [TH+2, W, 3C]

    # Three accumulating MXU matmuls over kh-offset row views — no 9x im2col
    # temporary.  The [TH, W, 3C] -> [TH*W, 3C] reshape is layout-free when
    # W % 8 == 0.  bf16 operands, f32 accumulation; bias seeds the accumulator.
    acc = b_ref[...].astype(jnp.float32)                          # [1, Cout]
    for kh in range(KH):
        zk = slab_kw[kh:kh + TH].reshape(TH * W, KW * C)
        acc = acc + jnp.dot(zk, w_ref[kh], preferred_element_type=jnp.float32)

    o_ref[0] = acc.reshape(TH, W, Cout).astype(o_ref.dtype)


def grid_feature_transform(features_nchw, weight, bias, *, row_tile=None,
                           out_dtype=jnp.float32):
    """Apply GridFeatureTransform's Conv2d(3x3, pad=1) to the GridFeatures batch view.

    features_nchw: [B, C_in, X, Y]    (PyTorch NCHW batch view of GridFeatures)
    weight:        [C_out, C_in, 3, 3]
    bias:          [C_out]
    out_dtype:     kernel store dtype.  f32 matches nn.Conv2d exactly; bf16
                   halves output HBM writeback (the v6e win) if downstream
                   GridFeatures consumers tolerate it.
    returns:       [B, C_out, X, Y]   (NCHW, matching nn.Conv2d output)
    """
    B, C_in, H, W = features_nchw.shape
    C_out = weight.shape[0]
    assert weight.shape == (C_out, C_in, KH, KW)
    assert bias.shape == (C_out,)

    # Generation-aware knobs: bigger tiles + higher VMEM limit on 128 MiB chips
    # (v5e/v6e), tighter on v7x (64 MiB VMEM).
    vmem_cap = _vmem_capacity_bytes()
    if row_tile is None:
        row_tile = 64 if vmem_cap >= 96 * _MIB else 32
    vmem_limit = min(int(vmem_cap * 3 // 4), 100 * _MIB)

    TH = _pick_row_tile(H, row_tile)       # perf cliff (not a bug) if H has
    n_t = H // TH                          # awkward factors or W % 8 != 0
    assert H % TH == 0

    # Lane-dense input channels: no-op (and no extra HBM pass) at real
    # GridFeatures sizes where Z*C == 128; only small-C formats get padded.
    # TODO(synk): for small-C memory formats, DMA the true-C last dim and pad
    # inside the kernel to avoid both the HBM pad pass and the inflated MXU K.
    Cip = C_in if C_in % LANES == 0 else _round_up(C_in, LANES)

    # Layout plumbing: NCHW -> NHWC (channels on lanes); the bf16 cast fuses
    # into the same XLA copy.  Output channels are never padded.
    x = jnp.transpose(features_nchw, (0, 2, 3, 1)).astype(jnp.bfloat16)
    if Cip != C_in:
        x = jnp.pad(x, ((0, 0), (0, 0), (0, 0), (0, Cip - C_in)))

    # Fold kw + input channels into one K dim per kh tap:
    #   w_folded[kh, kw*Cip + ci, co] = weight[co, ci, kh, kw]
    w_p = weight if Cip == C_in else jnp.pad(
        weight, ((0, 0), (0, Cip - C_in), (0, 0), (0, 0)))
    w_folded = jnp.transpose(w_p, (2, 3, 1, 0)).reshape(KH, KW * Cip, C_out)
    w_folded = w_folded.astype(jnp.bfloat16)
    b_row = bias.reshape(1, C_out).astype(jnp.float32)

    out = pl.pallas_call(
        _conv2d_kernel,
        out_shape=jax.ShapeDtypeStruct((B, H, W, C_out), out_dtype),
        grid_spec=pltpu.PrefetchScalarGridSpec(
            num_scalar_prefetch=0,
            grid=(B, n_t),
            in_specs=[
                # Clamped single-row halos above/below the tile (block size 1
                # on the H axis, so the index map returns a row index).
                pl.BlockSpec((1, 1, W, Cip),
                             lambda b, t: (b, jnp.maximum(t * TH - 1, 0), 0, 0)),
                # Row-tile body: only TH rows resident (not whole-H), so the
                # working set fits v7x's 64 MiB VMEM and megacore t-sharding
                # does not duplicate the input DMA.
                pl.BlockSpec((1, TH, W, Cip), lambda b, t: (b, t, 0, 0)),
                pl.BlockSpec((1, 1, W, Cip),
                             lambda b, t: (b, jnp.minimum((t + 1) * TH, H - 1), 0, 0)),
                # Folded weight + bias: constant index maps (fetched once).
                pl.BlockSpec((KH, KW * Cip, C_out), lambda b, t: (0, 0, 0)),
                pl.BlockSpec((1, C_out), lambda b, t: (0, 0)),
            ],
            out_specs=pl.BlockSpec((1, TH, W, C_out), lambda b, t: (b, t, 0, 0)),
        ),
        compiler_params=pltpu.CompilerParams(
            dimension_semantics=("parallel", "parallel"),
            vmem_limit_bytes=vmem_limit,
        ),
    )(x, x, x, w_folded, b_row)

    # NHWC -> NCHW to match nn.Conv2d's output convention (fuses with the cast).
    return jnp.transpose(out, (0, 3, 1, 2)).astype(features_nchw.dtype)


def _reference_conv2d(x_nchw, weight, bias):
    """Pure-JAX reference matching torch.nn.Conv2d(kernel=3, padding=1)."""
    out = lax.conv_general_dilated(
        x_nchw, weight,
        window_strides=(1, 1),
        padding=((1, 1), (1, 1)),
        dimension_numbers=("NCHW", "OIHW", "NCHW"),
    )
    return out + bias[None, :, None, None]


if __name__ == "__main__":
    key = jax.random.PRNGKey(0)
    k_x, k_w, k_b = jax.random.split(key, 3)

    # GridFeatures batch view in compressed b_zc_x_y format:
    # B=2, Z*C = 16 in-channels, grid X=Y=16.  Transform: Conv2d(16 -> 16, 3x3, pad=1).
    B, C_in, X, Y = 2, 16, 16, 16
    C_out = 16

    features = jax.random.normal(k_x, (B, C_in, X, Y), dtype=jnp.float32)
    # Deterministic Conv2d parameter init (synthetic; shapes from nn.Conv2d).
    weight = jax.random.normal(k_w, (C_out, C_in, KH, KW), dtype=jnp.float32) * 0.05
    bias = jax.random.normal(k_b, (C_out,), dtype=jnp.float32) * 0.05

    out = jax.jit(grid_feature_transform)(features, weight, bias)
    out = jax.block_until_ready(out)

    ref = jax.block_until_ready(_reference_conv2d(features, weight, bias))
    assert out.shape == (B, C_out, X, Y)
    # bf16 MXU inputs with f32 accumulation -> tolerance loosened accordingly.
    # (At real K = 9*128 the bf16 quantization error is somewhat larger than in
    # this small demo — documented numerics tradeoff for downstream consumers.)
    assert jnp.allclose(out, ref, atol=2e-2, rtol=2e-2), float(
        jnp.max(jnp.abs(out - ref)))

    # TODO(synk): GridFeatures bookkeeping (vertices, memory_format, grid_shape)
    # in from_conv_output is pure metadata passthrough with no compute to port.
    print("KERNEL_OK")
</pallas_src>

<mosaic_0001>
module attributes {stable_mosaic.version = 11 : i64} {
  func.func @_conv2d_kernel(%arg0: i32, %arg1: i32, %arg2: memref<1x1x16x128xbf16, #tpu.memory_space<vmem>>, %arg3: memref<1x16x16x128xbf16, #tpu.memory_space<vmem>>, %arg4: memref<1x1x16x128xbf16, #tpu.memory_space<vmem>>, %arg5: memref<3x384x16xbf16, #tpu.memory_space<vmem>>, %arg6: memref<1x16xf32, #tpu.memory_space<vmem>>, %arg7: memref<1x16x16x16xf32, #tpu.memory_space<vmem>>) attributes {dimension_semantics = [#tpu.dimension_semantics<parallel>, #tpu.dimension_semantics<parallel>], iteration_bounds = array<i64: 2, 1>, scalar_prefetch = 0 : i64, scratch_operands = 0 : i64, tpu.core_type = #tpu.core_type<tc>, window_params = [{transform_indices = @transform_0, window_bounds = array<i64: 1, 1, 16, 128>}, {transform_indices = @transform_1, window_bounds = array<i64: 1, 16, 16, 128>}, {transform_indices = @transform_2, window_bounds = array<i64: 1, 1, 16, 128>}, {pipeline_mode = #tpu.pipeline_mode<synchronous>, transform_indices = @transform_3, window_bounds = array<i64: 3, 384, 16>}, {pipeline_mode = #tpu.pipeline_mode<synchronous>, transform_indices = @transform_4, window_bounds = array<i64: 1, 16>}, {transform_indices = @transform_5, window_bounds = array<i64: 1, 16, 16, 16>}]} {
    %c0_i32 = arith.constant 0 : i32
    %0 = arith.cmpi sgt, %arg1, %c0_i32 : i32
    %c0 = arith.constant 0 : index
    %c0_0 = arith.constant 0 : index
    %c0_1 = arith.constant 0 : index
    %c0_2 = arith.constant 0 : index
    %1 = vector.load %arg2[%c0, %c0_0, %c0_1, %c0_2] : memref<1x1x16x128xbf16, #tpu.memory_space<vmem>>, vector<1x1x16x128xbf16>
    %2 = vector.shape_cast %1 : vector<1x1x16x128xbf16> to vector<1x16x128xbf16>
    %cst = arith.constant 0.000000e+00 : bf16
    %3 = vector.broadcast %cst : bf16 to vector<1x16x128xbf16>
    %4 = arith.select %0, %2, %3 : vector<1x16x128xbf16>
    %c1_i32 = arith.constant 1 : i32
    %5 = arith.addi %arg1, %c1_i32 : i32
    %c1_i32_3 = arith.constant 1 : i32
    %6 = arith.cmpi slt, %5, %c1_i32_3 : i32
    %c0_4 = arith.constant 0 : index
    %c0_5 = arith.constant 0 : index
    %c0_6 = arith.constant 0 : index
    %c0_7 = arith.constant 0 : index
    %7 = vector.load %arg4[%c0_4, %c0_5, %c0_6, %c0_7] : memref<1x1x16x128xbf16, #tpu.memory_space<vmem>>, vector<1x1x16x128xbf16>
    %8 = vector.shape_cast %7 : vector<1x1x16x128xbf16> to vector<1x16x128xbf16>
    %cst_8 = arith.constant 0.000000e+00 : bf16
    %9 = vector.broadcast %cst_8 : bf16 to vector<1x16x128xbf16>
    %10 = arith.select %6, %8, %9 : vector<1x16x128xbf16>
    %c0_9 = arith.constant 0 : index
    %c0_10 = arith.constant 0 : index
    %c0_11 = arith.constant 0 : index
    %c0_12 = arith.constant 0 : index
    %11 = vector.load %arg3[%c0_9, %c0_10, %c0_11, %c0_12] : memref<1x16x16x128xbf16, #tpu.memory_space<vmem>>, vector<1x16x16x128xbf16>
    %12 = vector.shape_cast %11 : vector<1x16x16x128xbf16> to vector<16x16x128xbf16>
    %13 = tpu.concatenate %4, %12, %10 in 0 : vector<1x16x128xbf16>, vector<16x16x128xbf16>, vector<1x16x128xbf16> -> vector<18x16x128xbf16>
    %cst_13 = arith.constant 0.000000e+00 : bf16
    %14 = vector.broadcast %cst_13 : bf16 to vector<18x1x128xbf16>
    %15 = vector.extract_strided_slice %13 {offsets = [0, 0, 0], sizes = [18, 15, 128], strides = [1, 1, 1]} : vector<18x16x128xbf16> to vector<18x15x128xbf16>
    %16 = tpu.concatenate %14, %15 in 1 : vector<18x1x128xbf16>, vector<18x15x128xbf16> -> vector<18x16x128xbf16>
    %17 = vector.extract_strided_slice %13 {offsets = [0, 1, 0], sizes = [18, 15, 128], strides = [1, 1, 1]} : vector<18x16x128xbf16> to vector<18x15x128xbf16>
    %18 = tpu.concatenate %17, %14 in 1 : vector<18x15x128xbf16>, vector<18x1x128xbf16> -> vector<18x16x128xbf16>
    %19 = tpu.concatenate %16, %13, %18 in 2 : vector<18x16x128xbf16>, vector<18x16x128xbf16>, vector<18x16x128xbf16> -> vector<18x16x384xbf16>
    %c0_14 = arith.constant 0 : index
    %c0_15 = arith.constant 0 : index
    %20 = vector.load %arg6[%c0_14, %c0_15] : memref<1x16xf32, #tpu.memory_space<vmem>>, vector<1x16xf32>
    %21 = vector.extract_strided_slice %19 {offsets = [0, 0, 0], sizes = [16, 16, 384], strides = [1, 1, 1]} : vector<18x16x384xbf16> to vector<16x16x384xbf16>
    %22 = vector.shape_cast %21 : vector<16x16x384xbf16> to vector<256x384xbf16>
    %c0_16 = arith.constant 0 : index
    %c0_17 = arith.constant 0 : index
    %c0_18 = arith.constant 0 : index
    %23 = vector.load %arg5[%c0_16, %c0_17, %c0_18] : memref<3x384x16xbf16, #tpu.memory_space<vmem>>, vector<1x384x16xbf16>
    %24 = vector.shape_cast %23 : vector<1x384x16xbf16> to vector<384x16xbf16>
    %cst_19 = arith.constant dense<0.000000e+00> : vector<256x16xf32>
    %25 = tpu.matmul %22, %24, %cst_19 {dimension_numbers = #tpu.dot_dimension_numbers<[1], [0], [0], [1], [0, 0, 1, 1], [], []>} : vector<256x384xbf16>, vector<384x16xbf16>, vector<256x16xf32> -> vector<256x16xf32>
    %26 = vector.broadcast %20 : vector<1x16xf32> to vector<256x16xf32>
    %27 = arith.addf %26, %25 : vector<256x16xf32>
    %28 = vector.extract_strided_slice %19 {offsets = [1, 0, 0], sizes = [16, 16, 384], strides = [1, 1, 1]} : vector<18x16x384xbf16> to vector<16x16x384xbf16>
    %29 = vector.shape_cast %28 : vector<16x16x384xbf16> to vector<256x384xbf16>
    %c1 = arith.constant 1 : index
    %c0_20 = arith.constant 0 : index
    %c0_21 = arith.constant 0 : index
    %30 = vector.load %arg5[%c1, %c0_20, %c0_21] : memref<3x384x16xbf16, #tpu.memory_space<vmem>>, vector<1x384x16xbf16>
    %31 = vector.shape_cast %30 : vector<1x384x16xbf16> to vector<384x16xbf16>
    %cst_22 = arith.constant dense<0.000000e+00> : vector<256x16xf32>
    %32 = tpu.matmul %29, %31, %cst_22 {dimension_numbers = #tpu.dot_dimension_numbers<[1], [0], [0], [1], [0, 0, 1, 1], [], []>} : vector<256x384xbf16>, vector<384x16xbf16>, vector<256x16xf32> -> vector<256x16xf32>
    %33 = arith.addf %27, %32 : vector<256x16xf32>
    %34 = vector.extract_strided_slice %19 {offsets = [2, 0, 0], sizes = [16, 16, 384], strides = [1, 1, 1]} : vector<18x16x384xbf16> to vector<16x16x384xbf16>
    %35 = vector.shape_cast %34 : vector<16x16x384xbf16> to vector<256x384xbf16>
    %c2 = arith.constant 2 : index
    %c0_23 = arith.constant 0 : index
    %c0_24 = arith.constant 0 : index
    %36 = vector.load %arg5[%c2, %c0_23, %c0_24] : memref<3x384x16xbf16, #tpu.memory_space<vmem>>, vector<1x384x16xbf16>
    %37 = vector.shape_cast %36 : vector<1x384x16xbf16> to vector<384x16xbf16>
    %cst_25 = arith.constant dense<0.000000e+00> : vector<256x16xf32>
    %38 = tpu.matmul %35, %37, %cst_25 {dimension_numbers = #tpu.dot_dimension_numbers<[1], [0], [0], [1], [0, 0, 1, 1], [], []>} : vector<256x384xbf16>, vector<384x16xbf16>, vector<256x16xf32> -> vector<256x16xf32>
    %39 = arith.addf %33, %38 : vector<256x16xf32>
    %40 = vector.shape_cast %39 : vector<256x16xf32> to vector<16x16x16xf32>
    %c0_26 = arith.constant 0 : index
    %c0_27 = arith.constant 0 : index
    %c0_28 = arith.constant 0 : index
    %c0_29 = arith.constant 0 : index
    %41 = vector.load %arg7[%c0_26, %c0_27, %c0_28, %c0_29] : memref<1x16x16x16xf32, #tpu.memory_space<vmem>>, vector<1x16x16x16xf32>
    %42 = vector.shape_cast %41 : vector<1x16x16x16xf32> to vector<16x16x16xf32>
    %43 = vector.shape_cast %40 : vector<16x16x16xf32> to vector<1x16x16x16xf32>
    tpu.vector_store %arg7[%c0_26, %c0_27, %c0_28, %c0_29], %43 {strides = array<i32>} : memref<1x16x16x16xf32, #tpu.memory_space<vmem>>, vector<1x16x16x16xf32>,
    return
  }
  func.func @transform_0(%arg0: i32, %arg1: i32) -> (i32, i32, i32, i32) {
    %c16_i32 = arith.constant 16 : i32
    %0 = arith.muli %arg1, %c16_i32 : i32
    %c1_i32 = arith.constant 1 : i32
    %1 = arith.subi %0, %c1_i32 : i32
    %c0_i32 = arith.constant 0 : i32
    %2 = arith.maxsi %1, %c0_i32 : i32
    %c0_i32_0 = arith.constant 0 : i32
    %c0_i32_1 = arith.constant 0 : i32
    %c0_i32_2 = arith.constant 0 : i32
    return %arg0, %2, %c0_i32_0, %c0_i32_1 : i32, i32, i32, i32
  }
  func.func @transform_1(%arg0: i32, %arg1: i32) -> (i32, i32, i32, i32) {
    %c0_i32 = arith.constant 0 : i32
    %c0_i32_0 = arith.constant 0 : i32
    %c0_i32_1 = arith.constant 0 : i32
    return %arg0, %arg1, %c0_i32, %c0_i32_0 : i32, i32, i32, i32
  }
  func.func @transform_2(%arg0: i32, %arg1: i32) -> (i32, i32, i32, i32) {
    %c1_i32 = arith.constant 1 : i32
    %0 = arith.addi %arg1, %c1_i32 : i32
    %c16_i32 = arith.constant 16 : i32
    %1 = arith.muli %0, %c16_i32 : i32
    %c15_i32 = arith.constant 15 : i32
    %2 = arith.minsi %1, %c15_i32 : i32
    %c0_i32 = arith.constant 0 : i32
    %c0_i32_0 = arith.constant 0 : i32
    %c0_i32_1 = arith.constant 0 : i32
    return %arg0, %2, %c0_i32, %c0_i32_0 : i32, i32, i32, i32
  }
  func.func @transform_3(%arg0: i32, %arg1: i32) -> (i32, i32, i32) {
    %c0_i32 = arith.constant 0 : i32
    %c0_i32_0 = arith.constant 0 : i32
    %c0_i32_1 = arith.constant 0 : i32
    %c0_i32_2 = arith.constant 0 : i32
    return %c0_i32, %c0_i32_0, %c0_i32_1 : i32, i32, i32
  }
  func.func @transform_4(%arg0: i32, %arg1: i32) -> (i32, i32) {
    %c0_i32 = arith.constant 0 : i32
    %c0_i32_0 = arith.constant 0 : i32
    %c0_i32_1 = arith.constant 0 : i32
    return %c0_i32, %c0_i32_0 : i32, i32
  }
  func.func @transform_5(%arg0: i32, %arg1: i32) -> (i32, i32, i32, i32) {
    %c0_i32 = arith.constant 0 : i32
    %c0_i32_0 = arith.constant 0 : i32
    %c0_i32_1 = arith.constant 0 : i32
    return %arg0, %arg1, %c0_i32, %c0_i32_0 : i32, i32, i32, i32
  }
}

</mosaic_0001>

<llo_original>
// kernel: grid_feature_transform.1
$region0: #{grid_feature_transform.1}
  #allocation0 [shape = 'u32[]', space=smem, size = 0x4, offset = 0x4, fixed_abs, tag = 'smem constant byte address 0x4 - core index']
  #allocation1 [shape = 'u32[144,128]{1,0:T(1,128)}', space=vmem, size = 0x12000, scoped, tag = 'internal scratch']
  %s0 = inlined_call_operand.vmem [shape: bf16[2,16,16,128], index: 0, kind: input, shape index: {}, may-alias: {0,1,2}]
  %s1 = inlined_call_operand.vmem [shape: bf16[2,16,16,128], index: 1, kind: input, shape index: {}, may-alias: {0,1,2}]
  %s2 = inlined_call_operand.vmem [shape: bf16[2,16,16,128], index: 2, kind: input, shape index: {}, may-alias: {0,1,2}]
  %s3 = inlined_call_operand.vmem [shape: bf16[3,384,16], index: 3, kind: input, shape index: {}]
  %s4 = inlined_call_operand.vmem [shape: f32[1,16], index: 4, kind: input, shape index: {}]
  %s5 = inlined_call_operand.vmem [shape: f32[2,16,16,16], index: 5, kind: output, shape index: {}]
  %s6 = sld [smem:[#allocation0]]
  $region53: #{grid_feature_transform.1} parent=0
    _
  %s8 = ssub.s32 1, %s6
  %s9 = scalar_select 0, %s8, %s6
  loop: start=0, step=1, limit=4
  $region2: #{grid_feature_transform.1} parent=0 // loop_pre_header
    _
  $region3: #{grid_feature_transform.1} parent=0 // loop_header
    %s11 = sphi 0, %s15
    %p12 = scmp.ge.s32.totalorder %s11, 4
    %s18 = sphi 0, %s30
    %s19 = sphi 0, %s26
    %s20 = sphi 0, %s18
    %s21 = sphi 0, %s19
    %s22 = sphi 0, %s20
    %s23 = sphi 0, %s21
    %s43 = sphi 0, %s45
    %s46 = sphi 0, %s43
    %s47 = sphi 0, %s46
    %s63 = sphi 0, %s47
    %s71 = sphi 0, %s73
    %s74 = sphi 0, %s71
    %s75 = sphi 0, %s74
    %s91 = sphi 0, %s75
    %s107 = sphi 0, %s109
    %s110 = sphi 0, %s107
    %s111 = sphi 0, %s110
    %s127 = sphi 0, %s111
    %s131 = sphi 0, %s131
    %s133 = sphi 0, %s131
    %s134 = sphi 0, %s133
    %s148 = sphi 0, %s134
    %s152 = sphi 0, %s152
    %s154 = sphi 0, %s152
    %s155 = sphi 0, %s154
    %s169 = sphi 0, %s155
    %s177 = sphi 0, %s179
    %s180 = sphi 0, %s177
    %s181 = sphi 0, %s180
    %s197 = sphi 0, %s181
  $region4: #{grid_feature_transform.1} parent=0 // loop_header_branch
    %14 = sbr.rel (%p12) target = $region8
  $region5: #{grid_feature_transform.1} parent=0 // loop_body
    %s16 = ssub.s32 %s11, 1
    %s17 = ssub.s32 %s11, 2
    %s24 = sadd.s32 1, %s19
    %p25 = scmp.ge.s32.totalorder %s24, 1
    %s26 = scalar_select %p25, 0, %s24
    %s27 = sadd.s32 1, %s18
    %s28 = scalar_select %p25, %s27, %s18
    %p29 = scmp.ge.s32.totalorder %s28, 2
    %s30 = scalar_select %p29, 0, %s28
    %s31 = smul.u32 %s19, 16
    %s32 = ssub.s32 %s31, 1
    %p33 = scmp.gt.s32.totalorder %s32, 0
    %s34 = scalar_select %p33, %s32, 0
    %s35 = smul.u32 %s26, 16
    %s36 = ssub.s32 %s35, 1
    %p37 = scmp.gt.s32.totalorder %s36, 0
    %s38 = scalar_select %p37, %s36, 0
    %s39 = ssub.s32 %s18, %s30
    %s40 = ssub.s32 %s34, %s38
    %s41 = sor.u32 %s39, %s40
    %p42 = scmp.eq.s32.totalorder %s41, 0
    %s44 = sadd.s32 %s43, 1
    %s45 = scalar_select %p42, %s43, %s44
    %p48 = pneg %p42
    %p49 = scmp.eq.s32.totalorder %s11, 1
    %p50 = por %p48, %p49
    %p51 = scmp.ne.s32.totalorder %s43, %s46
    %p52 = scmp.eq.s32.totalorder %s11, 0
    %p53 = por %p51, %p52
    %p54 = scmp.ne.s32.totalorder %s43, %s46
    %p55 = scmp.eq.s32.totalorder %s16, 1
    %p56 = por %p54, %p55
    %p57 = scmp.ne.s32.totalorder %s46, %s47
    %p58 = scmp.eq.s32.totalorder %s16, 0
    %p59 = por %p57, %p58
    %p60 = scmp.ne.s32.totalorder %s46, %s47
    %p61 = scmp.eq.s32.totalorder %s17, 1
    %p62 = por %p60, %p61
    %p64 = scmp.ne.s32.totalorder %s47, %s63
    %p65 = scmp.eq.s32.totalorder %s17, 0
    %p66 = por %p64, %p65
    %s67 = ssub.s32 %s18, %s30
    %s68 = ssub.s32 %s19, %s26
    %s69 = sor.u32 %s67, %s68
    %p70 = scmp.eq.s32.totalorder %s69, 0
    %s72 = sadd.s32 %s71, 1
    %s73 = scalar_select %p70, %s71, %s72
    %p76 = pneg %p70
    %p77 = scmp.eq.s32.totalorder %s11, 1
    %p78 = por %p76, %p77
    %p79 = scmp.ne.s32.totalorder %s71, %s74
    %p80 = scmp.eq.s32.totalorder %s11, 0
    %p81 = por %p79, %p80
    %p82 = scmp.ne.s32.totalorder %s71, %s74
    %p83 = scmp.eq.s32.totalorder %s16, 1
    %p84 = por %p82, %p83
    %p85 = scmp.ne.s32.totalorder %s74, %s75
    %p86 = scmp.eq.s32.totalorder %s16, 0
    %p87 = por %p85, %p86
    %p88 = scmp.ne.s32.totalorder %s74, %s75
    %p89 = scmp.eq.s32.totalorder %s17, 1
    %p90 = por %p88, %p89
    %p92 = scmp.ne.s32.totalorder %s75, %s91
    %p93 = scmp.eq.s32.totalorder %s17, 0
    %p94 = por %p92, %p93
    %s95 = sadd.s32 %s19, 1
    %s96 = smul.u32 %s95, 16
    %p97 = scmp.lt.s32.totalorder %s96, 15
    %s98 = scalar_select %p97, %s96, 15
    %s99 = sadd.s32 %s26, 1
    %s100 = smul.u32 %s99, 16
    %p101 = scmp.lt.s32.totalorder %s100, 15
    %s102 = scalar_select %p101, %s100, 15
    %s103 = ssub.s32 %s18, %s30
    %s104 = ssub.s32 %s98, %s102
    %s105 = sor.u32 %s103, %s104
    %p106 = scmp.eq.s32.totalorder %s105, 0
    %s108 = sadd.s32 %s107, 1
    %s109 = scalar_select %p106, %s107, %s108
    %p112 = pneg %p106
    %p113 = scmp.eq.s32.totalorder %s11, 1
    %p114 = por %p112, %p113
    %p115 = scmp.ne.s32.totalorder %s107, %s110
    %p116 = scmp.eq.s32.totalorder %s11, 0
    %p117 = por %p115, %p116
    %p118 = scmp.ne.s32.totalorder %s107, %s110
    %p119 = scmp.eq.s32.totalorder %s16, 1
    %p120 = por %p118, %p119
    %p121 = scmp.ne.s32.totalorder %s110, %s111
    %p122 = scmp.eq.s32.totalorder %s16, 0
    %p123 = por %p121, %p122
    %p124 = scmp.ne.s32.totalorder %s110, %s111
    %p125 = scmp.eq.s32.totalorder %s17, 1
    %p126 = por %p124, %p125
    %p128 = scmp.ne.s32.totalorder %s111, %s127
    %p129 = scmp.eq.s32.totalorder %s17, 0
    %p130 = por %p128, %p129
    %s132 = sadd.s32 %s131, 1
    %p135 = scmp.eq.s32.totalorder %s11, 1
    %p136 = scmp.ne.s32.totalorder %s131, %s133
    %p137 = scmp.eq.s32.totalorder %s11, 0
    %p138 = por %p136, %p137
    %p139 = scmp.ne.s32.totalorder %s131, %s133
    %p140 = scmp.eq.s32.totalorder %s16, 1
    %p141 = por %p139, %p140
    %p142 = scmp.ne.s32.totalorder %s133, %s134
    %p143 = scmp.eq.s32.totalorder %s16, 0
    %p144 = por %p142, %p143
    %p145 = scmp.ne.s32.totalorder %s133, %s134
    %p146 = scmp.eq.s32.totalorder %s17, 1
    %p147 = por %p145, %p146
    %p149 = scmp.ne.s32.totalorder %s134, %s148
    %p150 = scmp.eq.s32.totalorder %s17, 0
    %p151 = por %p149, %p150
    %s153 = sadd.s32 %s152, 1
    %p156 = scmp.eq.s32.totalorder %s11, 1
    %p157 = scmp.ne.s32.totalorder %s152, %s154
    %p158 = scmp.eq.s32.totalorder %s11, 0
    %p159 = por %p157, %p158
    %p160 = scmp.ne.s32.totalorder %s152, %s154
    %p161 = scmp.eq.s32.totalorder %s16, 1
    %p162 = por %p160, %p161
    %p163 = scmp.ne.s32.totalorder %s154, %s155
    %p164 = scmp.eq.s32.totalorder %s16, 0
    %p165 = por %p163, %p164
    %p166 = scmp.ne.s32.totalorder %s154, %s155
    %p167 = scmp.eq.s32.totalorder %s17, 1
    %p168 = por %p166, %p167
    %p170 = scmp.ne.s32.totalorder %s155, %s169
    %p171 = scmp.eq.s32.totalorder %s17, 0
    %p172 = por %p170, %p171
    %s173 = ssub.s32 %s18, %s30
    %s174 = ssub.s32 %s19, %s26
    %s175 = sor.u32 %s173, %s174
    %p176 = scmp.eq.s32.totalorder %s175, 0
    %s178 = sadd.s32 %s177, 1
    %s179 = scalar_select %p176, %s177, %s178
    %p182 = pneg %p176
    %p183 = scmp.eq.s32.totalorder %s11, 1
    %p184 = por %p182, %p183
    %p185 = scmp.ne.s32.totalorder %s177, %s180
    %p186 = scmp.eq.s32.totalorder %s11, 0
    %p187 = por %p185, %p186
    %p188 = scmp.ne.s32.totalorder %s177, %s180
    %p189 = scmp.eq.s32.totalorder %s16, 1
    %p190 = por %p188, %p189
    %p191 = scmp.ne.s32.totalorder %s180, %s181
    %p192 = scmp.eq.s32.totalorder %s16, 0
    %p193 = por %p191, %p192
    %p194 = scmp.ne.s32.totalorder %s180, %s181
    %p195 = scmp.eq.s32.totalorder %s17, 1
    %p196 = por %p194, %p195
    %p198 = scmp.ne.s32.totalorder %s181, %s197
    %p199 = scmp.eq.s32.totalorder %s17, 0
    %p200 = por %p198, %p199
    %p201 = scmp.le.s32.totalorder 1, %s11
    %p202 = scmp.lt.s32.totalorder %s11, 3
    %p203 = pnand %p201, %p202
    %p204 = pneg %p203
    // Predicated region
    $region9: #{grid_feature_transform.1} parent=5 // pred_check
      _
    $region10: #{grid_feature_transform.1} parent=5 // pred_check_branch
      %206 = sbr.rel (%p203) target = $region12
    $region11: #{grid_feature_transform.1} parent=5 // pred_region
      %s207 = ssub.s32 %s11, 1
      // Predicated region
      $region13: #{grid_feature_transform.1} parent=11 // pred_check
        %p208 = pneg %p144
      $region14: #{grid_feature_transform.1} parent=11 // pred_check_branch
        %210 = sbr.rel (%p208) target = $region16
      $region15: #{grid_feature_transform.1} parent=11 // pred_region
        _
      $region16: #{grid_feature_transform.1} parent=11 // pred_fallthru
        _
      // Predicated region
      $region17: #{grid_feature_transform.1} parent=11 // pred_check
        %p211 = pneg %p165
      $region18: #{grid_feature_transform.1} parent=11 // pred_check_branch
        %213 = sbr.rel (%p211) target = $region20
      $region19: #{grid_feature_transform.1} parent=11 // pred_region
        _
      $region20: #{grid_feature_transform.1} parent=11 // pred_fallthru
        _
    $region12: #{grid_feature_transform.1} parent=5 // pred_fallthru
      _
    %p214 = scmp.lt.s32.totalorder %s11, 2
    // Predicated region
    $region21: #{grid_feature_transform.1} parent=5 // pred_check
      %p215 = pneg %p214
    $region22: #{grid_feature_transform.1} parent=5 // pred_check_branch
      %217 = sbr.rel (%p215) target = $region24
    $region23: #{grid_feature_transform.1} parent=5 // pred_region
      // Predicated region
      $region25: #{grid_feature_transform.1} parent=23 // pred_check
        %p218 = pneg %p53
      $region26: #{grid_feature_transform.1} parent=23 // pred_check_branch
        %220 = sbr.rel (%p218) target = $region28
      $region27: #{grid_feature_transform.1} parent=23 // pred_region
        %s221 = smul.u32 %s19, 16
        %s222 = ssub.s32 %s221, 1
        %p223 = scmp.gt.s32.totalorder %s222, 0
        %s224 = scalar_select %p223, %s222, 0
        %p225 = scmp.lt.s32.totalorder %s18, 1
        %s226 = scalar_select %p225, %s18, 1
        %p227 = scmp.lt.s32.totalorder %s224, 15
        %s228 = scalar_select %p227, %s224, 15
        %s229 = smul.addr %s228, 2
        %s230 = smul.addr %s226, 32
        %s231 = sadd.s32 %s229, %s230
        %s232 = smul.addr %s231, 4
        %s233 = scalar_lea.vmem %s0, %s232
        %s234 = smul.u32 %s19, 16
        %s235 = ssub.s32 %s234, 1
        %p236 = scmp.gt.s32.totalorder %s235, 0
        %s237 = scalar_select %p236, %s235, 0
      $region28: #{grid_feature_transform.1} parent=23 // pred_fallthru
        _
      // Predicated region
      $region29: #{grid_feature_transform.1} parent=23 // pred_check
        %p238 = pneg %p81
      $region30: #{grid_feature_transform.1} parent=23 // pred_check_branch
        %240 = sbr.rel (%p238) target = $region32
      $region31: #{grid_feature_transform.1} parent=23 // pred_region
        %s241 = smul.u32 16, %s19
        %p242 = scmp.lt.s32.totalorder %s18, 1
        %s243 = scalar_select %p242, %s18, 1
        %p244 = scmp.lt.s32.totalorder %s241, 15
        %s245 = scalar_select %p244, %s241, 15
        %s246 = smul.addr %s245, 2
        %s247 = smul.addr %s243, 32
        %s248 = sadd.s32 %s246, %s247
        %s249 = smul.addr %s248, 4
        %s250 = scalar_lea.vmem %s1, %s249
        %s251 = smul.u32 16, %s19
      $region32: #{grid_feature_transform.1} parent=23 // pred_fallthru
        _
      // Predicated region
      $region33: #{grid_feature_transform.1} parent=23 // pred_check
        %p252 = pneg %p117
      $region34: #{grid_feature_transform.1} parent=23 // pred_check_branch
        %254 = sbr.rel (%p252) target = $region36
      $region35: #{grid_feature_transform.1} parent=23 // pred_region
        %s255 = sadd.s32 %s19, 1
        %s256 = smul.u32 %s255, 16
        %p257 = scmp.lt.s32.totalorder %s256, 15
        %s258 = scalar_select %p257, %s256, 15
        %p259 = scmp.lt.s32.totalorder %s18, 1
        %s260 = scalar_select %p259, %s18, 1
        %p261 = scmp.lt.s32.totalorder %s258, 15
        %s262 = scalar_select %p261, %s258, 15
        %s263 = smul.addr %s262, 2
        %s264 = smul.addr %s260, 32
        %s265 = sadd.s32 %s263, %s264
        %s266 = smul.addr %s265, 4
        %s267 = scalar_lea.vmem %s2, %s266
        %s268 = sadd.s32 %s19, 1
        %s269 = smul.u32 %s268, 16
        %p270 = scmp.lt.s32.totalorder %s269, 15
        %s271 = scalar_select %p270, %s269, 15
      $region36: #{grid_feature_transform.1} parent=23 // pred_fallthru
        _
    $region24: #{grid_feature_transform.1} parent=5 // pred_fallthru
      _
    %p272 = scmp.le.s32.totalorder 1, %s11
    %p273 = scmp.lt.s32.totalorder %s11, 3
    %p274 = pnand %p272, %p273
    %p275 = pneg %p274
    // Predicated region
    $region37: #{grid_feature_transform.1} parent=5 // pred_check
      _
    $region38: #{grid_feature_transform.1} parent=5 // pred_check_branch
      %277 = sbr.rel (%p274) target = $region40
    $region39: #{grid_feature_transform.1} parent=5 // pred_region
      %s278 = ssub.s32 %s11, 1
      %s279 = smul.u32 %s21, 16
      %s280 = ssub.s32 %s279, 1
      %p281 = scmp.gt.s32.totalorder %s280, 0
      %s282 = scalar_select %p281, %s280, 0
      %p283 = scmp.lt.s32.totalorder %s20, 1
      %s284 = scalar_select %p283, %s20, 1
      %p285 = scmp.lt.s32.totalorder %s282, 15
      %s286 = scalar_select %p285, %s282, 15
      %s287 = smul.addr %s286, 2
      %s288 = smul.addr %s284, 32
      %s289 = sadd.s32 %s287, %s288
      %s290 = smul.addr %s289, 4
      %s291 = scalar_lea.vmem %s0, %s290
      %p292 = pneg %p59
      %p293 = pneg %p56
      %s294 = smul.u32 16, %s21
      %p295 = scmp.lt.s32.totalorder %s20, 1
      %s296 = scalar_select %p295, %s20, 1
      %p297 = scmp.lt.s32.totalorder %s294, 15
      %s298 = scalar_select %p297, %s294, 15
      %s299 = smul.addr %s298, 2
      %s300 = smul.addr %s296, 32
      %s301 = sadd.s32 %s299, %s300
      %s302 = smul.addr %s301, 4
      %s303 = scalar_lea.vmem %s1, %s302
      %p304 = pneg %p87
      %p305 = pneg %p84
      %s306 = sadd.s32 %s21, 1
      %s307 = smul.u32 %s306, 16
      %p308 = scmp.lt.s32.totalorder %s307, 15
      %s309 = scalar_select %p308, %s307, 15
      %p310 = scmp.lt.s32.totalorder %s20, 1
      %s311 = scalar_select %p310, %s20, 1
      %p312 = scmp.lt.s32.totalorder %s309, 15
      %s313 = scalar_select %p312, %s309, 15
      %s314 = smul.addr %s313, 2
      %s315 = smul.addr %s311, 32
      %s316 = sadd.s32 %s314, %s315
      %s317 = smul.addr %s316, 4
      %s318 = scalar_lea.vmem %s2, %s317
      %p319 = pneg %p123
      %p320 = pneg %p120
      %p321 = pneg %p144
      %p322 = pneg %p141
      %p323 = pneg %p165
      %p324 = pneg %p162
      %p325 = pneg %p193
      %p326 = pneg %p190
      %s327 = smul.u32 16, %s21
      %p328 = scmp.lt.s32.totalorder %s20, 1
      %s329 = scalar_select %p328, %s20, 1
      %p330 = scmp.lt.s32.totalorder %s327, 15
      %s331 = scalar_select %p330, %s327, 15
      %s332 = smul.addr %s331, 2
      %s333 = smul.addr %s329, 32
      %s334 = sadd.s32 %s332, %s333
      %s335 = smul.addr %s334, 8
      %s336 = scalar_lea.vmem %s5, %s335
      %s337 = smul.u32 %s21, 16
      %s338 = ssub.s32 %s337, 1
      %p339 = scmp.gt.s32.totalorder %s338, 0
      %s340 = scalar_select %p339, %s338, 0
      %p341 = scmp.lt.s32.totalorder %s20, 1
      %s342 = scalar_select %p341, %s20, 1
      %p343 = scmp.lt.s32.totalorder %s340, 15
      %s344 = scalar_select %p343, %s340, 15
      %s345 = smul.addr %s344, 2
      %s346 = smul.addr %s342, 32
      %s347 = sadd.s32 %s345, %s346
      %s348 = smul.addr %s347, 4
      %s349 = scalar_lea.vmem %s0, %s348
      %s350 = smul.u32 %s21, 16
      %s351 = ssub.s32 %s350, 1
      %p352 = scmp.gt.s32.totalorder %s351, 0
      %s353 = scalar_select %p352, %s351, 0
      %s354 = smul.u32 16, %s21
      %p355 = scmp.lt.s32.totalorder %s20, 1
      %s356 = scalar_select %p355, %s20, 1
      %p357 = scmp.lt.s32.totalorder %s354, 15
      %s358 = scalar_select %p357, %s354, 15
      %s359 = smul.addr %s358, 2
      %s360 = smul.addr %s356, 32
      %s361 = sadd.s32 %s359, %s360
      %s362 = smul.addr %s361, 4
      %s363 = scalar_lea.vmem %s1, %s362
      %s364 = smul.u32 16, %s21
      %s365 = sadd.s32 %s21, 1
      %s366 = smul.u32 %s365, 16
      %p367 = scmp.lt.s32.totalorder %s366, 15
      %s368 = scalar_select %p367, %s366, 15
      %p369 = scmp.lt.s32.totalorder %s20, 1
      %s370 = scalar_select %p369, %s20, 1
      %p371 = scmp.lt.s32.totalorder %s368, 15
      %s372 = scalar_select %p371, %s368, 15
      %s373 = smul.addr %s372, 2
      %s374 = smul.addr %s370, 32
      %s375 = sadd.s32 %s373, %s374
      %s376 = smul.addr %s375, 4
      %s377 = scalar_lea.vmem %s2, %s376
      %s378 = sadd.s32 %s21, 1
      %s379 = smul.u32 %s378, 16
      %p380 = scmp.lt.s32.totalorder %s379, 15
      %s381 = scalar_select %p380, %s379, 15
      %s382 = smul.u32 16, %s21
      %p383 = scmp.lt.s32.totalorder %s20, 1
      %s384 = scalar_select %p383, %s20, 1
      %p385 = scmp.lt.s32.totalorder %s382, 15
      %s386 = scalar_select %p385, %s382, 15
      %s387 = smul.addr %s386, 2
      %s388 = smul.addr %s384, 32
      %s389 = sadd.s32 %s387, %s388
      %s390 = smul.addr %s389, 8
      %s391 = scalar_lea.vmem %s5, %s390
      %s392 = smul.u32 16, %s21
      %p394 = scmp.gt.s32.totalorder %s21, 0
      %v395 = vld [vmem:[%s349] sm:$0xf]
      %v396 = vld [vmem:[%s349 + $0x4] sm:$0xf]
      %s397 = scalar_select %p394, 1, 0
      %v398 = vstv %s397
      %vm399 = vcmp.eq.s32.totalorder %v398, 1
      %v400 = vsel %vm399, %v395, 0
      %v401 = vsel %vm399, %v396, 0
      %s402 = sadd.s32 %s21, 1
      %p403 = scmp.lt.s32.totalorder %s402, 1
      %v404 = vld [vmem:[%s377] sm:$0xf]
      %v405 = vld [vmem:[%s377 + $0x4] sm:$0xf]
      %s406 = scalar_select %p403, 1, 0
      %v407 = vstv %s406
      %vm408 = vcmp.eq.s32.totalorder %v407, 1
      %v409 = vsel %vm408, %v404, 0
      %v410 = vsel %vm408, %v405, 0
      %v411 = vld [vmem:[%s363] sm:$0xf]
      %v412 = vld [vmem:[%s363 + $0x4] sm:$0xf]
      %v413 = vld [vmem:[%s363 + $0x8] sm:$0xf]
      %v414 = vld [vmem:[%s363 + $0xc] sm:$0xf]
      %v415 = vld [vmem:[%s363 + $0x10] sm:$0xf]
      %v416 = vld [vmem:[%s363 + $0x14] sm:$0xf]
      %v417 = vld [vmem:[%s363 + $0x18] sm:$0xf]
      %v418 = vld [vmem:[%s363 + $0x1c] sm:$0xf]
      %v419 = vld [vmem:[%s363 + $0x20] sm:$0xf]
      %v420 = vld [vmem:[%s363 + $0x24] sm:$0xf]
      %v421 = vld [vmem:[%s363 + $0x28] sm:$0xf]
      %v422 = vld [vmem:[%s363 + $0x2c] sm:$0xf]
      %v423 = vld [vmem:[%s363 + $0x30] sm:$0xf]
      %v424 = vld [vmem:[%s363 + $0x34] sm:$0xf]
      %v425 = vld [vmem:[%s363 + $0x38] sm:$0xf]
      %v426 = vld [vmem:[%s363 + $0x3c] sm:$0xf]
      %v427 = vld [vmem:[%s363 + $0x40] sm:$0xf]
      %v428 = vld [vmem:[%s363 + $0x44] sm:$0xf]
      %v429 = vld [vmem:[%s363 + $0x48] sm:$0xf]
      %v430 = vld [vmem:[%s363 + $0x4c] sm:$0xf]
      %v431 = vld [vmem:[%s363 + $0x50] sm:$0xf]
      %v432 = vld [vmem:[%s363 + $0x54] sm:$0xf]
      %v433 = vld [vmem:[%s363 + $0x58] sm:$0xf]
      %v434 = vld [vmem:[%s363 + $0x5c] sm:$0xf]
      %v435 = vld [vmem:[%s363 + $0x60] sm:$0xf]
      %v436 = vld [vmem:[%s363 + $0x64] sm:$0xf]
      %v437 = vld [vmem:[%s363 + $0x68] sm:$0xf]
      %v438 = vld [vmem:[%s363 + $0x6c] sm:$0xf]
      %v439 = vld [vmem:[%s363 + $0x70] sm:$0xf]
      %v440 = vld [vmem:[%s363 + $0x74] sm:$0xf]
      %v441 = vld [vmem:[%s363 + $0x78] sm:$0xf]
      %v442 = vld [vmem:[%s363 + $0x7c] sm:$0xf]
      %v479 = vunpack.c.l.b16 %v400
      %v480 = vunpack.c.l.b16 %v401
      %v481 = vunpack.c.l.b16 %v411
      %v482 = vunpack.c.l.b16 %v412
      %v483 = vunpack.c.l.b16 %v413
      %v484 = vunpack.c.l.b16 %v414
      %v485 = vunpack.c.l.b16 %v415
      %v486 = vunpack.c.l.b16 %v416
      %v487 = vunpack.c.l.b16 %v417
      %v488 = vunpack.c.l.b16 %v418
      %v489 = vunpack.c.l.b16 %v419
      %v490 = vunpack.c.l.b16 %v420
      %v491 = vunpack.c.l.b16 %v421
      %v492 = vunpack.c.l.b16 %v422
      %v493 = vunpack.c.l.b16 %v423
      %v494 = vunpack.c.l.b16 %v424
      %v495 = vunpack.c.l.b16 %v425
      %v496 = vunpack.c.l.b16 %v426
      %v497 = vunpack.c.l.b16 %v427
      %v498 = vunpack.c.l.b16 %v428
      %v499 = vunpack.c.l.b16 %v429
      %v500 = vunpack.c.l.b16 %v430
      %v501 = vunpack.c.l.b16 %v431
      %v502 = vunpack.c.l.b16 %v432
      %v503 = vunpack.c.l.b16 %v433
      %v504 = vunpack.c.l.b16 %v434
      %v505 = vunpack.c.l.b16 %v435
      %v506 = vunpack.c.l.b16 %v436
      %v507 = vunpack.c.l.b16 %v437
      %v508 = vunpack.c.l.b16 %v438
      %v509 = vunpack.c.l.b16 %v439
      %v510 = vunpack.c.l.b16 %v440
      %v511 = vunpack.c.l.b16 %v441
      %v512 = vunpack.c.l.b16 %v442
      %v513 = vunpack.c.l.b16 %v409
      %v514 = vunpack.c.l.b16 %v410
      %v515 = vpack.c.b16 %v480, %v479
      %v516 = vpack.c.b16 %v482, %v481
      %v517 = vpack.c.b16 %v484, %v483
      %v518 = vpack.c.b16 %v486, %v485
      %v519 = vpack.c.b16 %v488, %v487
      %v520 = vpack.c.b16 %v490, %v489
      %v521 = vpack.c.b16 %v492, %v491
      %v522 = vpack.c.b16 %v494, %v493
      %v523 = vpack.c.b16 %v496, %v495
      %v524 = vpack.c.b16 %v498, %v497
      %v525 = vpack.c.b16 %v500, %v499
      %v526 = vpack.c.b16 %v502, %v501
      %v527 = vpack.c.b16 %v504, %v503
      %v528 = vpack.c.b16 %v506, %v505
      %v529 = vpack.c.b16 %v508, %v507
      %v530 = vpack.c.b16 %v510, %v509
      %v531 = vpack.c.b16 %v512, %v511
      %v532 = vpack.c.b16 %v514, %v513
      %v534 = vshrl.u32 %v515, 16
      %v536 = vrot.slane %v534, 7
      %v537 = vshll.u32 %v515, 16
      %v539 = vor.u32 %v536, %v537
      %v541 = vshrl.u32 %v516, 16
      %v543 = vrot.slane %v541, 7
      %v544 = vshll.u32 %v516, 16
      %v546 = vor.u32 %v543, %v544
      %v548 = vshrl.u32 %v517, 16
      %v550 = vrot.slane %v548, 7
      %v551 = vshll.u32 %v517, 16
      %v553 = vor.u32 %v550, %v551
      %v555 = vshrl.u32 %v518, 16
      %v557 = vrot.slane %v555, 7
      %v558 = vshll.u32 %v518, 16
      %v560 = vor.u32 %v557, %v558
      %v562 = vshrl.u32 %v519, 16
      %v564 = vrot.slane %v562, 7
      %v565 = vshll.u32 %v519, 16
      %v567 = vor.u32 %v564, %v565
      %v569 = vshrl.u32 %v520, 16
      %v571 = vrot.slane %v569, 7
      %v572 = vshll.u32 %v520, 16
      %v574 = vor.u32 %v571, %v572
      %v576 = vshrl.u32 %v521, 16
      %v578 = vrot.slane %v576, 7
      %v579 = vshll.u32 %v521, 16
      %v581 = vor.u32 %v578, %v579
      %v583 = vshrl.u32 %v522, 16
      %v585 = vrot.slane %v583, 7
      %v586 = vshll.u32 %v522, 16
      %v588 = vor.u32 %v585, %v586
      %v590 = vshrl.u32 %v523, 16
      %v592 = vrot.slane %v590, 7
      %v593 = vshll.u32 %v523, 16
      %v595 = vor.u32 %v592, %v593
      %v597 = vshrl.u32 %v524, 16
      %v599 = vrot.slane %v597, 7
      %v600 = vshll.u32 %v524, 16
      %v602 = vor.u32 %v599, %v600
      %v604 = vshrl.u32 %v525, 16
      %v606 = vrot.slane %v604, 7
      %v607 = vshll.u32 %v525, 16
      %v609 = vor.u32 %v606, %v607
      %v611 = vshrl.u32 %v526, 16
      %v613 = vrot.slane %v611, 7
      %v614 = vshll.u32 %v526, 16
      %v616 = vor.u32 %v613, %v614
      %v618 = vshrl.u32 %v527, 16
      %v620 = vrot.slane %v618, 7
      %v621 = vshll.u32 %v527, 16
      %v623 = vor.u32 %v620, %v621
      %v625 = vshrl.u32 %v528, 16
      %v627 = vrot.slane %v625, 7
      %v628 = vshll.u32 %v528, 16
      %v630 = vor.u32 %v627, %v628
      %v632 = vshrl.u32 %v529, 16
      %v634 = vrot.slane %v632, 7
      %v635 = vshll.u32 %v529, 16
      %v637 = vor.u32 %v634, %v635
      %v639 = vshrl.u32 %v530, 16
      %v641 = vrot.slane %v639, 7
      %v642 = vshll.u32 %v530, 16
      %v644 = vor.u32 %v641, %v642
      %v646 = vshrl.u32 %v531, 16
      %v648 = vrot.slane %v646, 7
      %v649 = vshll.u32 %v531, 16
      %v651 = vor.u32 %v648, %v649
      %v653 = vshrl.u32 %v532, 16
      %v655 = vrot.slane %v653, 7
      %v656 = vshll.u32 %v532, 16
      %v658 = vor.u32 %v655, %v656
      %vm677 = vcmask 1040384
      %vm678 = vsmask.f32 256
      %vm679 = vmand %vm677, %vm678
      %v680 = vsel %vm679, 0, %v539
      %v681 = vsel %vm679, 0, %v546
      %v682 = vsel %vm679, 0, %v553
      %v683 = vsel %vm679, 0, %v560
      %v684 = vsel %vm679, 0, %v567
      %v685 = vsel %vm679, 0, %v574
      %v686 = vsel %vm679, 0, %v581
      %v687 = vsel %vm679, 0, %v588
      %v688 = vsel %vm679, 0, %v595
      %v689 = vsel %vm679, 0, %v602
      %v690 = vsel %vm679, 0, %v609
      %v691 = vsel %vm679, 0, %v616
      %v692 = vsel %vm679, 0, %v623
      %v693 = vsel %vm679, 0, %v630
      %v694 = vsel %vm679, 0, %v637
      %v695 = vsel %vm679, 0, %v644
      %v696 = vsel %vm679, 0, %v651
      %v697 = vsel %vm679, 0, %v658
      %v698 = vrot.slane %v537, 1
      %v699 = vor.u32 %v534, %v698
      %v700 = vrot.slane %v544, 1
      %v701 = vor.u32 %v541, %v700
      %v702 = vrot.slane %v551, 1
      %v703 = vor.u32 %v548, %v702
      %v704 = vrot.slane %v558, 1
      %v705 = vor.u32 %v555, %v704
      %v706 = vrot.slane %v565, 1
      %v707 = vor.u32 %v562, %v706
      %v708 = vrot.slane %v572, 1
      %v709 = vor.u32 %v569, %v708
      %v710 = vrot.slane %v579, 1
      %v711 = vor.u32 %v576, %v710
      %v712 = vrot.slane %v586, 1
      %v713 = vor.u32 %v583, %v712
      %v714 = vrot.slane %v593, 1
      %v715 = vor.u32 %v590, %v714
      %v716 = vrot.slane %v600, 1
      %v717 = vor.u32 %v597, %v716
      %v718 = vrot.slane %v607, 1
      %v719 = vor.u32 %v604, %v718
      %v720 = vrot.slane %v614, 1
      %v721 = vor.u32 %v611, %v720
      %v722 = vrot.slane %v621, 1
      %v723 = vor.u32 %v618, %v722
      %v724 = vrot.slane %v628, 1
      %v725 = vor.u32 %v625, %v724
      %v726 = vrot.slane %v635, 1
      %v727 = vor.u32 %v632, %v726
      %v728 = vrot.slane %v642, 1
      %v729 = vor.u32 %v639, %v728
      %v730 = vrot.slane %v649, 1
      %v731 = vor.u32 %v646, %v730
      %v732 = vrot.slane %v656, 1
      %v733 = vor.u32 %v653, %v732
      %vm752 = vcmask 1047552
      %vm753 = vsmask.f32 7424
      %vm754 = vmand %vm752, %vm753
      %v755 = vsel %vm754, %v699, 0
      %v756 = vsel %vm754, %v701, 0
      %v757 = vsel %vm754, %v703, 0
      %v758 = vsel %vm754, %v705, 0
      %v759 = vsel %vm754, %v707, 0
      %v760 = vsel %vm754, %v709, 0
      %v761 = vsel %vm754, %v711, 0
      %v762 = vsel %vm754, %v713, 0
      %v763 = vsel %vm754, %v715, 0
      %v764 = vsel %vm754, %v717, 0
      %v765 = vsel %vm754, %v719, 0
      %v766 = vsel %vm754, %v721, 0
      %v767 = vsel %vm754, %v723, 0
      %v768 = vsel %vm754, %v725, 0
      %v769 = vsel %vm754, %v727, 0
      %v770 = vsel %vm754, %v729, 0
      %v771 = vsel %vm754, %v731, 0
      %v772 = vsel %vm754, %v733, 0
      %v791 = vld [vmem:[%s4] sm:$0x1]
      %v792 = vld [vmem:[%s3] sm:$0xf]
      %v793 = vld [vmem:[%s3 + $0x4] sm:$0xf]
      %v794 = vld [vmem:[%s3 + $0x8] sm:$0xf]
      %v795 = vld [vmem:[%s3 + $0xc] sm:$0xf]
      %v796 = vld [vmem:[%s3 + $0x10] sm:$0xf]
      %v797 = vld [vmem:[%s3 + $0x14] sm:$0xf]
      %v798 = vld [vmem:[%s3 + $0x18] sm:$0xf]
      %v799 = vld [vmem:[%s3 + $0x1c] sm:$0xf]
      %v800 = vld [vmem:[%s3 + $0x20] sm:$0xf]
      %v801 = vld [vmem:[%s3 + $0x24] sm:$0xf]
      %v802 = vld [vmem:[%s3 + $0x28] sm:$0xf]
      %v803 = vld [vmem:[%s3 + $0x2c] sm:$0xf]
      %v804 = vld [vmem:[%s3 + $0x30] sm:$0xf]
      %v805 = vld [vmem:[%s3 + $0x34] sm:$0xf]
      %v806 = vld [vmem:[%s3 + $0x38] sm:$0xf]
      %v807 = vld [vmem:[%s3 + $0x3c] sm:$0xf]
      %v808 = vld [vmem:[%s3 + $0x40] sm:$0xf]
      %v809 = vld [vmem:[%s3 + $0x44] sm:$0xf]
      %v810 = vld [vmem:[%s3 + $0x48] sm:$0xf]
      %v811 = vld [vmem:[%s3 + $0x4c] sm:$0xf]
      %v812 = vld [vmem:[%s3 + $0x50] sm:$0xf]
      %v813 = vld [vmem:[%s3 + $0x54] sm:$0xf]
      %v814 = vld [vmem:[%s3 + $0x58] sm:$0xf]
      %v815 = vld [vmem:[%s3 + $0x5c] sm:$0xf]
      %v816 = vld [vmem:[%s3 + $0x60] sm:$0xf]
      %v817 = vld [vmem:[%s3 + $0x64] sm:$0xf]
      %v818 = vld [vmem:[%s3 + $0x68] sm:$0xf]
      %v819 = vld [vmem:[%s3 + $0x6c] sm:$0xf]
      %v820 = vld [vmem:[%s3 + $0x70] sm:$0xf]
      %v821 = vld [vmem:[%s3 + $0x74] sm:$0xf]
      %v822 = vld [vmem:[%s3 + $0x78] sm:$0xf]
      %v823 = vld [vmem:[%s3 + $0x7c] sm:$0xf]
      %v824 = vld [vmem:[%s3 + $0x80] sm:$0xf]
      %v825 = vld [vmem:[%s3 + $0x84] sm:$0xf]
      %v826 = vld [vmem:[%s3 + $0x88] sm:$0xf]
      %v827 = vld [vmem:[%s3 + $0x8c] sm:$0xf]
      %v828 = vld [vmem:[%s3 + $0x90] sm:$0xf]
      %v829 = vld [vmem:[%s3 + $0x94] sm:$0xf]
      %v830 = vld [vmem:[%s3 + $0x98] sm:$0xf]
      %v831 = vld [vmem:[%s3 + $0x9c] sm:$0xf]
      %v832 = vld [vmem:[%s3 + $0xa0] sm:$0xf]
      %v833 = vld [vmem:[%s3 + $0xa4] sm:$0xf]
      %v834 = vld [vmem:[%s3 + $0xa8] sm:$0xf]
      %v835 = vld [vmem:[%s3 + $0xac] sm:$0xf]
      %v836 = vld [vmem:[%s3 + $0xb0] sm:$0xf]
      %v837 = vld [vmem:[%s3 + $0xb4] sm:$0xf]
      %v838 = vld [vmem:[%s3 + $0xb8] sm:$0xf]
      %v839 = vld [vmem:[%s3 + $0xbc] sm:$0xf]
      %v888 = vunpack.c.l.b16 %v792
      %v889 = vunpack.c.l.b16 %v793
      %v890 = vunpack.c.l.b16 %v794
      %v891 = vunpack.c.l.b16 %v795
      %v892 = vunpack.c.l.b16 %v796
      %v893 = vunpack.c.l.b16 %v797
      %v894 = vunpack.c.l.b16 %v798
      %v895 = vunpack.c.l.b16 %v799
      %v896 = vunpack.c.l.b16 %v800
      %v897 = vunpack.c.l.b16 %v801
      %v898 = vunpack.c.l.b16 %v802
      %v899 = vunpack.c.l.b16 %v803
      %v900 = vunpack.c.l.b16 %v804
      %v901 = vunpack.c.l.b16 %v805
      %v902 = vunpack.c.l.b16 %v806
      %v903 = vunpack.c.l.b16 %v807
      %v904 = vunpack.c.l.b16 %v808
      %v905 = vunpack.c.l.b16 %v809
      %v906 = vunpack.c.l.b16 %v810
      %v907 = vunpack.c.l.b16 %v811
      %v908 = vunpack.c.l.b16 %v812
      %v909 = vunpack.c.l.b16 %v813
      %v910 = vunpack.c.l.b16 %v814
      %v911 = vunpack.c.l.b16 %v815
      %v912 = vunpack.c.l.b16 %v816
      %v913 = vunpack.c.l.b16 %v817
      %v914 = vunpack.c.l.b16 %v818
      %v915 = vunpack.c.l.b16 %v819
      %v916 = vunpack.c.l.b16 %v820
      %v917 = vunpack.c.l.b16 %v821
      %v918 = vunpack.c.l.b16 %v822
      %v919 = vunpack.c.l.b16 %v823
      %v920 = vunpack.c.l.b16 %v824
      %v921 = vunpack.c.l.b16 %v825
      %v922 = vunpack.c.l.b16 %v826
      %v923 = vunpack.c.l.b16 %v827
      %v924 = vunpack.c.l.b16 %v828
      %v925 = vunpack.c.l.b16 %v829
      %v926 = vunpack.c.l.b16 %v830
      %v927 = vunpack.c.l.b16 %v831
      %v928 = vunpack.c.l.b16 %v832
      %v929 = vunpack.c.l.b16 %v833
      %v930 = vunpack.c.l.b16 %v834
      %v931 = vunpack.c.l.b16 %v835
      %v932 = vunpack.c.l.b16 %v836
      %v933 = vunpack.c.l.b16 %v837
      %v934 = vunpack.c.l.b16 %v838
      %v935 = vunpack.c.l.b16 %v839
      %v936 = vpack.c.b16 %v889, %v888
      %v937 = vpack.c.b16 %v891, %v890
      %v938 = vpack.c.b16 %v893, %v892
      %v939 = vpack.c.b16 %v895, %v894
      %v940 = vpack.c.b16 %v897, %v896
      %v941 = vpack.c.b16 %v899, %v898
      %v942 = vpack.c.b16 %v901, %v900
      %v943 = vpack.c.b16 %v903, %v902
      %v944 = vpack.c.b16 %v905, %v904
      %v945 = vpack.c.b16 %v907, %v906
      %v946 = vpack.c.b16 %v909, %v908
      %v947 = vpack.c.b16 %v911, %v910
      %v948 = vpack.c.b16 %v913, %v912
      %v949 = vpack.c.b16 %v915, %v914
      %v950 = vpack.c.b16 %v917, %v916
      %v951 = vpack.c.b16 %v919, %v918
      %v952 = vpack.c.b16 %v921, %v920
      %v953 = vpack.c.b16 %v923, %v922
      %v954 = vpack.c.b16 %v925, %v924
      %v955 = vpack.c.b16 %v927, %v926
      %v956 = vpack.c.b16 %v929, %v928
      %v957 = vpack.c.b16 %v931, %v930
      %v958 = vpack.c.b16 %v933, %v932
      %v959 = vpack.c.b16 %v935, %v934
      %984 = vmatprep.subr.bf16.mxu0 0
      %985 = vmatpush1.bf16.msra.mxu0 %v936
      %986 = vmatprep.subr.bf16.mxu0 0
      %987 = vmatpush1.bf16.msra.mxu0 %v937
      %988 = vmatprep.subr.bf16.mxu0 0
      %989 = vmatpush1.bf16.msra.mxu0 %v938
      %990 = vmatprep.subr.bf16.mxu0 0
      %991 = vmatpush1.bf16.msra.mxu0 %v939
      %992 = vmatprep.subr.bf16.mxu0 0
      %993 = vmatpush1.bf16.msra.mxu0 %v940
      %994 = vmatprep.subr.bf16.mxu0 0
      %995 = vmatpush1.bf16.msra.mxu0 %v941
      %996 = vmatprep.subr.bf16.mxu0 0
      %997 = vmatpush1.bf16.msra.mxu0 %v942
      %998 = vmatprep.subr.bf16.mxu0 0
      %999 = vmatpush1.bf16.msra.mxu0 %v943
      %1000 = vmatprep.subr.bf16.mxu0 0
      %1001 = vmatpush1.bf16.msra.mxu0 %v944
      %1002 = vmatprep.subr.bf16.mxu0 0
      %1003 = vmatpush1.bf16.msra.mxu0 %v945
      %1004 = vmatprep.subr.bf16.mxu0 0
      %1005 = vmatpush1.bf16.msra.mxu0 %v946
      %1006 = vmatprep.subr.bf16.mxu0 0
      %1007 = vmatpush1.bf16.msra.mxu0 %v947
      %1008 = vmatprep.subr.bf16.mxu0 0
      %1009 = vmatpush1.bf16.msra.mxu0 %v948
      %1010 = vmatprep.subr.bf16.mxu0 0
      %1011 = vmatpush1.bf16.msra.mxu0 %v949
      %1012 = vmatprep.subr.bf16.mxu0 0
      %1013 = vmatpush1.bf16.msra.mxu0 %v950
      %1014 = vmatprep.subr.bf16.mxu0 0
      %1015 = vmatpush1.bf16.msra.mxu0 %v951
      %1016 = vmatprep.mubr.bf16.mxu0 %v515
      %1017 = vmatmul.mubr.bf16.gmra.mrb[0].mxu0 %v680
      %v1018 = vpop.f32.mrb[0].mxu0
      %v1019 = vadd.f32 0.0, %v1018
      %v1020 = vpop.f32.mrb[0].mxu0
      %v1021 = vpop.f32.mrb[0].mxu0
      %v1022 = vadd.f32 0.0, %v1021
      %v1023 = vpop.f32.mrb[0].mxu0
      %1024 = vmatprep.mubr.bf16.mxu0 %v516
      %1025 = vmatmul.mubr.bf16.gmra.mrb[0].mxu0 %v681
      %v1026 = vpop.f32.mrb[0].mxu0
      %v1027 = vadd.f32 0.0, %v1026
      %v1028 = vpop.f32.mrb[0].mxu0
      %v1029 = vpop.f32.mrb[0].mxu0
      %v1030 = vadd.f32 0.0, %v1029
      %v1031 = vpop.f32.mrb[0].mxu0
      %1032 = vmatprep.mubr.bf16.mxu0 %v517
      %1033 = vmatmul.mubr.bf16.gmra.mrb[0].mxu0 %v682
      %v1034 = vpop.f32.mrb[0].mxu0
      %v1035 = vadd.f32 0.0, %v1034
      %v1036 = vpop.f32.mrb[0].mxu0
      %v1037 = vpop.f32.mrb[0].mxu0
      %v1038 = vadd.f32 0.0, %v1037
      %v1039 = vpop.f32.mrb[0].mxu0
      %1040 = vmatprep.mubr.bf16.mxu0 %v518
      %1041 = vmatmul.mubr.bf16.gmra.mrb[0].mxu0 %v683
      %v1042 = vpop.f32.mrb[0].mxu0
      %v1043 = vadd.f32 0.0, %v1042
      %v1044 = vpop.f32.mrb[0].mxu0
      %v1045 = vpop.f32.mrb[0].mxu0
      %v1046 = vadd.f32 0.0, %v1045
      %v1047 = vpop.f32.mrb[0].mxu0
      %1048 = vmatprep.mubr.bf16.mxu0 %v519
      %1049 = vmatmul.mubr.bf16.gmra.mrb[0].mxu0 %v684
      %v1050 = vpop.f32.mrb[0].mxu0
      %v1051 = vadd.f32 0.0, %v1050
      %v1052 = vpop.f32.mrb[0].mxu0
      %v1053 = vpop.f32.mrb[0].mxu0
      %v1054 = vadd.f32 0.0, %v1053
      %v1055 = vpop.f32.mrb[0].mxu0
      %1056 = vmatprep.mubr.bf16.mxu0 %v520
      %1057 = vmatmul.mubr.bf16.gmra.mrb[0].mxu0 %v685
      %v1058 = vpop.f32.mrb[0].mxu0
      %v1059 = vadd.f32 0.0, %v1058
      %v1060 = vpop.f32.mrb[0].mxu0
      %v1061 = vpop.f32.mrb[0].mxu0
      %v1062 = vadd.f32 0.0, %v1061
      %v1063 = vpop.f32.mrb[0].mxu0
      %1064 = vmatprep.mubr.bf16.mxu0 %v521
      %1065 = vmatmul.mubr.bf16.gmra.mrb[0].mxu0 %v686
      %v1066 = vpop.f32.mrb[0].mxu0
      %v1067 = vadd.f32 0.0, %v1066
      %v1068 = vpop.f32.mrb[0].mxu0
      %v1069 = vpop.f32.mrb[0].mxu0
      %v1070 = vadd.f32 0.0, %v1069
      %v1071 = vpop.f32.mrb[0].mxu0
      %1072 = vmatprep.mubr.bf16.mxu0 %v522
      %1073 = vmatmul.mubr.bf16.gmra.mrb[0].mxu0 %v687
      %v1074 = vpop.f32.mrb[0].mxu0
      %v1075 = vadd.f32 0.0, %v1074
      %v1076 = vpop.f32.mrb[0].mxu0
      %v1077 = vpop.f32.mrb[0].mxu0
      %v1078 = vadd.f32 0.0, %v1077
      %v1079 = vpop.f32.mrb[0].mxu0
      %1080 = vmatprep.mubr.bf16.mxu0 %v523
      %1081 = vmatmul.mubr.bf16.gmra.mrb[0].mxu0 %v688
      %v1082 = vpop.f32.mrb[0].mxu0
      %v1083 = vadd.f32 0.0, %v1082
      %v1084 = vpop.f32.mrb[0].mxu0
      %v1085 = vpop.f32.mrb[0].mxu0
      %v1086 = vadd.f32 0.0, %v1085
      %v1087 = vpop.f32.mrb[0].mxu0
      %1088 = vmatprep.mubr.bf16.mxu0 %v524
      %1089 = vmatmul.mubr.bf16.gmra.mrb[0].mxu0 %v689
      %v1090 = vpop.f32.mrb[0].mxu0
      %v1091 = vadd.f32 0.0, %v1090
      %v1092 = vpop.f32.mrb[0].mxu0
      %v1093 = vpop.f32.mrb[0].mxu0
      %v1094 = vadd.f32 0.0, %v1093
      %v1095 = vpop.f32.mrb[0].mxu0
      %1096 = vmatprep.mubr.bf16.mxu0 %v525
      %1097 = vmatmul.mubr.bf16.gmra.mrb[0].mxu0 %v690
      %v1098 = vpop.f32.mrb[0].mxu0
      %v1099 = vadd.f32 0.0, %v1098
      %v1100 = vpop.f32.mrb[0].mxu0
      %v1101 = vpop.f32.mrb[0].mxu0
      %v1102 = vadd.f32 0.0, %v1101
      %v1103 = vpop.f32.mrb[0].mxu0
      %1104 = vmatprep.mubr.bf16.mxu0 %v526
      %1105 = vmatmul.mubr.bf16.gmra.mrb[0].mxu0 %v691
      %v1106 = vpop.f32.mrb[0].mxu0
      %v1107 = vadd.f32 0.0, %v1106
      %v1108 = vpop.f32.mrb[0].mxu0
      %v1109 = vpop.f32.mrb[0].mxu0
      %v1110 = vadd.f32 0.0, %v1109
      %v1111 = vpop.f32.mrb[0].mxu0
      %1112 = vmatprep.mubr.bf16.mxu0 %v527
      %1113 = vmatmul.mubr.bf16.gmra.mrb[0].mxu0 %v692
      %v1114 = vpop.f32.mrb[0].mxu0
      %v1115 = vadd.f32 0.0, %v1114
      %v1116 = vpop.f32.mrb[0].mxu0
      %v1117 = vpop.f32.mrb[0].mxu0
      %v1118 = vadd.f32 0.0, %v1117
      %v1119 = vpop.f32.mrb[0].mxu0
      %1120 = vmatprep.mubr.bf16.mxu0 %v528
      %1121 = vmatmul.mubr.bf16.gmra.mrb[0].mxu0 %v693
      %v1122 = vpop.f32.mrb[0].mxu0
      %v1123 = vadd.f32 0.0, %v1122
      %v1124 = vpop.f32.mrb[0].mxu0
      %v1125 = vpop.f32.mrb[0].mxu0
      %v1126 = vadd.f32 0.0, %v1125
      %v1127 = vpop.f32.mrb[0].mxu0
      %1128 = vmatprep.mubr.bf16.mxu0 %v529
      %1129 = vmatmul.mubr.bf16.gmra.mrb[0].mxu0 %v694
      %v1130 = vpop.f32.mrb[0].mxu0
      %v1131 = vadd.f32 0.0, %v1130
      %v1132 = vpop.f32.mrb[0].mxu0
      %v1133 = vpop.f32.mrb[0].mxu0
      %v1134 = vadd.f32 0.0, %v1133
      %v1135 = vpop.f32.mrb[0].mxu0
      %1136 = vmatprep.mubr.bf16.mxu0 %v530
      %1137 = vmatmul.mubr.bf16.gmra.mrb[0].mxu0 %v695
      %v1138 = vpop.f32.mrb[0].mxu0
      %v1139 = vadd.f32 0.0, %v1138
      %v1140 = vpop.f32.mrb[0].mxu0
      %v1141 = vpop.f32.mrb[0].mxu0
      %v1142 = vadd.f32 0.0, %v1141
      %v1143 = vpop.f32.mrb[0].mxu0
      %1144 = vdwg.mxu0
      %1145 = vmatprep.subr.bf16.mxu0 0
      %1146 = vmatpush1.bf16.msra.mxu0 %v952
      %1147 = vmatprep.subr.bf16.mxu0 0
      %1148 = vmatpush1.bf16.msra.mxu0 %v953
      %1149 = vmatprep.subr.bf16.mxu0 0
      %1150 = vmatpush1.bf16.msra.mxu0 %v954
      %1151 = vmatprep.subr.bf16.mxu0 0
      %1152 = vmatpush1.bf16.msra.mxu0 %v955
      %1153 = vmatprep.subr.bf16.mxu0 0
      %1154 = vmatpush1.bf16.msra.mxu0 %v956
      %1155 = vmatprep.subr.bf16.mxu0 0
      %1156 = vmatpush1.bf16.msra.mxu0 %v957
      %1157 = vmatprep.subr.bf16.mxu0 0
      %1158 = vmatpush1.bf16.msra.mxu0 %v958
      %1159 = vmatprep.subr.bf16.mxu0 0
      %1160 = vmatpush1.bf16.msra.mxu0 %v959
      %1161 = vmatprep.subr.bf16.mxu0 0
      %1162 = vmatpush1.bf16.msra.mxu0 0
      %1163 = vmatprep.subr.bf16.mxu0 0
      %1164 = vmatpush1.bf16.msra.mxu0 0
      %1165 = vmatprep.subr.bf16.mxu0 0
      %1166 = vmatpush1.bf16.msra.mxu0 0
      %1167 = vmatprep.subr.bf16.mxu0 0
      %1168 = vmatpush1.bf16.msra.mxu0 0
      %1169 = vmatprep.subr.bf16.mxu0 0
      %1170 = vmatpush1.bf16.msra.mxu0 0
      %1171 = vmatprep.subr.bf16.mxu0 0
      %1172 = vmatpush1.bf16.msra.mxu0 0
      %1173 = vmatprep.subr.bf16.mxu0 0
      %1174 = vmatpush1.bf16.msra.mxu0 0
      %1175 = vmatprep.subr.bf16.mxu0 0
      %1176 = vmatpush1.bf16.msra.mxu0 0
      %1177 = vmatprep.mubr.bf16.mxu0 0
      %1178 = vmatmul.mubr.bf16.gmra.mrb[0].mxu0 %v755
      %v1179 = vpop.f32.mrb[0].mxu0
      %v1180 = vadd.f32 %v1019, %v1179
      %v1181 = vpop.f32.mrb[0].mxu0
      %v1182 = vpop.f32.mrb[0].mxu0
      %v1183 = vadd.f32 %v1022, %v1182
      %v1184 = vpop.f32.mrb[0].mxu0
      %1185 = vmatprep.mubr.bf16.mxu0 0
      %1186 = vmatmul.mubr.bf16.gmra.mrb[0].mxu0 %v756
      %v1187 = vpop.f32.mrb[0].mxu0
      %v1188 = vadd.f32 %v1027, %v1187
      %v1189 = vpop.f32.mrb[0].mxu0
      %v1190 = vpop.f32.mrb[0].mxu0
      %v1191 = vadd.f32 %v1030, %v1190
      %v1192 = vpop.f32.mrb[0].mxu0
      %1193 = vmatprep.mubr.bf16.mxu0 0
      %1194 = vmatmul.mubr.bf16.gmra.mrb[0].mxu0 %v757
      %v1195 = vpop.f32.mrb[0].mxu0
      %v1196 = vadd.f32 %v1035, %v1195
      %v1197 = vpop.f32.mrb[0].mxu0
      %v1198 = vpop.f32.mrb[0].mxu0
      %v1199 = vadd.f32 %v1038, %v1198
      %v1200 = vpop.f32.mrb[0].mxu0
      %1201 = vmatprep.mubr.bf16.mxu0 0
      %1202 = vmatmul.mubr.bf16.gmra.mrb[0].mxu0 %v758
      %v1203 = vpop.f32.mrb[0].mxu0
      %v1204 = vadd.f32 %v1043, %v1203
      %v1205 = vpop.f32.mrb[0].mxu0
      %v1206 = vpop.f32.mrb[0].mxu0
      %v1207 = vadd.f32 %v1046, %v1206
      %v1208 = vpop.f32.mrb[0].mxu0
      %1209 = vmatprep.mubr.bf16.mxu0 0
      %1210 = vmatmul.mubr.bf16.gmra.mrb[0].mxu0 %v759
      %v1211 = vpop.f32.mrb[0].mxu0
      %v1212 = vadd.f32 %v1051, %v1211
      %v1213 = vpop.f32.mrb[0].mxu0
      %v1214 = vpop.f32.mrb[0].mxu0
      %v1215 = vadd.f32 %v1054, %v1214
      %v1216 = vpop.f32.mrb[0].mxu0
      %1217 = vmatprep.mubr.bf16.mxu0 0
      %1218 = vmatmul.mubr.bf16.gmra.mrb[0].mxu0 %v760
      %v1219 = vpop.f32.mrb[0].mxu0
      %v1220 = vadd.f32 %v1059, %v1219
      %v1221 = vpop.f32.mrb[0].mxu0
      %v1222 = vpop.f32.mrb[0].mxu0
      %v1223 = vadd.f32 %v1062, %v1222
      %v1224 = vpop.f32.mrb[0].mxu0
      %1225 = vmatprep.mubr.bf16.mxu0 0
      %1226 = vmatmul.mubr.bf16.gmra.mrb[0].mxu0 %v761
      %v1227 = vpop.f32.mrb[0].mxu0
      %v1228 = vadd.f32 %v1067, %v1227
      %v1229 = vpop.f32.mrb[0].mxu0
      %v1230 = vpop.f32.mrb[0].mxu0
      %v1231 = vadd.f32 %v1070, %v1230
      %v1232 = vpop.f32.mrb[0].mxu0
      %1233 = vmatprep.mubr.bf16.mxu0 0
      %1234 = vmatmul.mubr.bf16.gmra.mrb[0].mxu0 %v762
      %v1235 = vpop.f32.mrb[0].mxu0
      %v1236 = vadd.f32 %v1075, %v1235
      %v1237 = vpop.f32.mrb[0].mxu0
      %v1238 = vpop.f32.mrb[0].mxu0
      %v1239 = vadd.f32 %v1078, %v1238
      %v1240 = vpop.f32.mrb[0].mxu0
      %1241 = vmatprep.mubr.bf16.mxu0 0
      %1242 = vmatmul.mubr.bf16.gmra.mrb[0].mxu0 %v763
      %v1243 = vpop.f32.mrb[0].mxu0
      %v1244 = vadd.f32 %v1083, %v1243
      %v1245 = vpop.f32.mrb[0].mxu0
      %v1246 = vpop.f32.mrb[0].mxu0
      %v1247 = vadd.f32 %v1086, %v1246
      %v1248 = vpop.f32.mrb[0].mxu0
      %1249 = vmatprep.mubr.bf16.mxu0 0
      %1250 = vmatmul.mubr.bf16.gmra.mrb[0].mxu0 %v764
      %v1251 = vpop.f32.mrb[0].mxu0
      %v1252 = vadd.f32 %v1091, %v1251
      %v1253 = vpop.f32.mrb[0].mxu0
      %v1254 = vpop.f32.mrb[0].mxu0
      %v1255 = vadd.f32 %v1094, %v1254
      %v1256 = vpop.f32.mrb[0].mxu0
      %1257 = vmatprep.mubr.bf16.mxu0 0
      %1258 = vmatmul.mubr.bf16.gmra.mrb[0].mxu0 %v765
      %v1259 = vpop.f32.mrb[0].mxu0
      %v1260 = vadd.f32 %v1099, %v1259
      %v1261 = vpop.f32.mrb[0].mxu0
      %v1262 = vpop.f32.mrb[0].mxu0
      %v1263 = vadd.f32 %v1102, %v1262
      %v1264 = vpop.f32.mrb[0].mxu0
      %1265 = vmatprep.mubr.bf16.mxu0 0
      %1266 = vmatmul.mubr.bf16.gmra.mrb[0].mxu0 %v766
      %v1267 = vpop.f32.mrb[0].mxu0
      %v1268 = vadd.f32 %v1107, %v1267
      %v1269 = vpop.f32.mrb[0].mxu0
      %v1270 = vpop.f32.mrb[0].mxu0
      %v1271 = vadd.f32 %v1110, %v1270
      %v1272 = vpop.f32.mrb[0].mxu0
      %1273 = vmatprep.mubr.bf16.mxu0 0
      %1274 = vmatmul.mubr.bf16.gmra.mrb[0].mxu0 %v767
      %v1275 = vpop.f32.mrb[0].mxu0
      %v1276 = vadd.f32 %v1115, %v1275
      %v1277 = vpop.f32.mrb[0].mxu0
      %v1278 = vpop.f32.mrb[0].mxu0
      %v1279 = vadd.f32 %v1118, %v1278
      %v1280 = vpop.f32.mrb[0].mxu0
      %1281 = vmatprep.mubr.bf16.mxu0 0
      %1282 = vmatmul.mubr.bf16.gmra.mrb[0].mxu0 %v768
      %v1283 = vpop.f32.mrb[0].mxu0
      %v1284 = vadd.f32 %v1123, %v1283
      %v1285 = vpop.f32.mrb[0].mxu0
      %v1286 = vpop.f32.mrb[0].mxu0
      %v1287 = vadd.f32 %v1126, %v1286
      %v1288 = vpop.f32.mrb[0].mxu0
      %1289 = vmatprep.mubr.bf16.mxu0 0
      %1290 = vmatmul.mubr.bf16.gmra.mrb[0].mxu0 %v769
      %v1291 = vpop.f32.mrb[0].mxu0
      %v1292 = vadd.f32 %v1131, %v1291
      %v1293 = vpop.f32.mrb[0].mxu0
      %v1294 = vpop.f32.mrb[0].mxu0
      %v1295 = vadd.f32 %v1134, %v1294
      %v1296 = vpop.f32.mrb[0].mxu0
      %1297 = vmatprep.mubr.bf16.mxu0 0
      %1298 = vmatmul.mubr.bf16.gmra.mrb[0].mxu0 %v770
      %v1299 = vpop.f32.mrb[0].mxu0
      %v1300 = vadd.f32 %v1139, %v1299
      %v1301 = vpop.f32.mrb[0].mxu0
      %v1302 = vpop.f32.mrb[0].mxu0
      %v1303 = vadd.f32 %v1142, %v1302
      %v1304 = vpop.f32.mrb[0].mxu0
      %1305 = vdwg.mxu0
      %v1307 = vlaneseq
      %v1308 = vshrl.u32 %v1307, 7
      %v1309 = vsub.s32 0, %v1308
      %v1310 = vrot.slane %v791, %v1309
      %v1312 = vadd.f32 %v1310, %v1180
      %v1313 = vadd.f32 %v1310, %v1183
      %v1314 = vadd.f32 %v1310, %v1188
      %v1315 = vadd.f32 %v1310, %v1191
      %v1316 = vadd.f32 %v1310, %v1196
      %v1317 = vadd.f32 %v1310, %v1199
      %v1318 = vadd.f32 %v1310, %v1204
      %v1319 = vadd.f32 %v1310, %v1207
      %v1320 = vadd.f32 %v1310, %v1212
      %v1321 = vadd.f32 %v1310, %v1215
      %v1322 = vadd.f32 %v1310, %v1220
      %v1323 = vadd.f32 %v1310, %v1223
      %v1324 = vadd.f32 %v1310, %v1228
      %v1325 = vadd.f32 %v1310, %v1231
      %v1326 = vadd.f32 %v1310, %v1236
      %v1327 = vadd.f32 %v1310, %v1239
      %v1328 = vadd.f32 %v1310, %v1244
      %v1329 = vadd.f32 %v1310, %v1247
      %v1330 = vadd.f32 %v1310, %v1252
      %v1331 = vadd.f32 %v1310, %v1255
      %v1332 = vadd.f32 %v1310, %v1260
      %v1333 = vadd.f32 %v1310, %v1263
      %v1334 = vadd.f32 %v1310, %v1268
      %v1335 = vadd.f32 %v1310, %v1271
      %v1336 = vadd.f32 %v1310, %v1276
      %v1337 = vadd.f32 %v1310, %v1279
      %v1338 = vadd.f32 %v1310, %v1284
      %v1339 = vadd.f32 %v1310, %v1287
      %v1340 = vadd.f32 %v1310, %v1292
      %v1341 = vadd.f32 %v1310, %v1295
      %v1342 = vadd.f32 %v1310, %v1300
      %v1343 = vadd.f32 %v1310, %v1303
      %s1344 = scalar_lea.vmem %s3, 192
      %v1345 = vld [vmem:[%s1344] sm:$0xf]
      %v1346 = vld [vmem:[%s1344 + $0x4] sm:$0xf]
      %v1347 = vld [vmem:[%s1344 + $0x8] sm:$0xf]
      %v1348 = vld [vmem:[%s1344 + $0xc] sm:$0xf]
      %v1349 = vld [vmem:[%s1344 + $0x10] sm:$0xf]
      %v1350 = vld [vmem:[%s1344 + $0x14] sm:$0xf]
      %v1351 = vld [vmem:[%s1344 + $0x18] sm:$0xf]
      %v1352 = vld [vmem:[%s1344 + $0x1c] sm:$0xf]
      %v1353 = vld [vmem:[%s1344 + $0x20] sm:$0xf]
      %v1354 = vld [vmem:[%s1344 + $0x24] sm:$0xf]
      %v1355 = vld [vmem:[%s1344 + $0x28] sm:$0xf]
      %v1356 = vld [vmem:[%s1344 + $0x2c] sm:$0xf]
      %v1357 = vld [vmem:[%s1344 + $0x30] sm:$0xf]
      %v1358 = vld [vmem:[%s1344 + $0x34] sm:$0xf]
      %v1359 = vld [vmem:[%s1344 + $0x38] sm:$0xf]
      %v1360 = vld [vmem:[%s1344 + $0x3c] sm:$0xf]
      %v1361 = vld [vmem:[%s1344 + $0x40] sm:$0xf]
      %v1362 = vld [vmem:[%s1344 + $0x44] sm:$0xf]
      %v1363 = vld [vmem:[%s1344 + $0x48] sm:$0xf]
      %v1364 = vld [vmem:[%s1344 + $0x4c] sm:$0xf]
      %v1365 = vld [vmem:[%s1344 + $0x50] sm:$0xf]
      %v1366 = vld [vmem:[%s1344 + $0x54] sm:$0xf]
      %v1367 = vld [vmem:[%s1344 + $0x58] sm:$0xf]
      %v1368 = vld [vmem:[%s1344 + $0x5c] sm:$0xf]
      %v1369 = vld [vmem:[%s1344 + $0x60] sm:$0xf]
      %v1370 = vld [vmem:[%s1344 + $0x64] sm:$0xf]
      %v1371 = vld [vmem:[%s1344 + $0x68] sm:$0xf]
      %v1372 = vld [vmem:[%s1344 + $0x6c] sm:$0xf]
      %v1373 = vld [vmem:[%s1344 + $0x70] sm:$0xf]
      %v1374 = vld [vmem:[%s1344 + $0x74] sm:$0xf]
      %v1375 = vld [vmem:[%s1344 + $0x78] sm:$0xf]
      %v1376 = vld [vmem:[%s1344 + $0x7c] sm:$0xf]
      %v1377 = vld [vmem:[%s1344 + $0x80] sm:$0xf]
      %v1378 = vld [vmem:[%s1344 + $0x84] sm:$0xf]
      %v1379 = vld [vmem:[%s1344 + $0x88] sm:$0xf]
      %v1380 = vld [vmem:[%s1344 + $0x8c] sm:$0xf]
      %v1381 = vld [vmem:[%s1344 + $0x90] sm:$0xf]
      %v1382 = vld [vmem:[%s1344 + $0x94] sm:$0xf]
      %v1383 = vld [vmem:[%s1344 + $0x98] sm:$0xf]
      %v1384 = vld [vmem:[%s1344 + $0x9c] sm:$0xf]
      %v1385 = vld [vmem:[%s1344 + $0xa0] sm:$0xf]
      %v1386 = vld [vmem:[%s1344 + $0xa4] sm:$0xf]
      %v1387 = vld [vmem:[%s1344 + $0xa8] sm:$0xf]
      %v1388 = vld [vmem:[%s1344 + $0xac] sm:$0xf]
      %v1389 = vld [vmem:[%s1344 + $0xb0] sm:$0xf]
      %v1390 = vld [vmem:[%s1344 + $0xb4] sm:$0xf]
      %v1391 = vld [vmem:[%s1344 + $0xb8] sm:$0xf]
      %v1392 = vld [vmem:[%s1344 + $0xbc] sm:$0xf]
      %v1441 = vunpack.c.l.b16 %v1345
      %v1442 = vunpack.c.l.b16 %v1346
      %v1443 = vunpack.c.l.b16 %v1347
      %v1444 = vunpack.c.l.b16 %v1348
      %v1445 = vunpack.c.l.b16 %v1349
      %v1446 = vunpack.c.l.b16 %v1350
      %v1447 = vunpack.c.l.b16 %v1351
      %v1448 = vunpack.c.l.b16 %v1352
      %v1449 = vunpack.c.l.b16 %v1353
      %v1450 = vunpack.c.l.b16 %v1354
      %v1451 = vunpack.c.l.b16 %v1355
      %v1452 = vunpack.c.l.b16 %v1356
      %v1453 = vunpack.c.l.b16 %v1357
      %v1454 = vunpack.c.l.b16 %v1358
      %v1455 = vunpack.c.l.b16 %v1359
      %v1456 = vunpack.c.l.b16 %v1360
      %v1457 = vunpack.c.l.b16 %v1361
      %v1458 = vunpack.c.l.b16 %v1362
      %v1459 = vunpack.c.l.b16 %v1363
      %v1460 = vunpack.c.l.b16 %v1364
      %v1461 = vunpack.c.l.b16 %v1365
      %v1462 = vunpack.c.l.b16 %v1366
      %v1463 = vunpack.c.l.b16 %v1367
      %v1464 = vunpack.c.l.b16 %v1368
      %v1465 = vunpack.c.l.b16 %v1369
      %v1466 = vunpack.c.l.b16 %v1370
      %v1467 = vunpack.c.l.b16 %v1371
      %v1468 = vunpack.c.l.b16 %v1372
      %v1469 = vunpack.c.l.b16 %v1373
      %v1470 = vunpack.c.l.b16 %v1374
      %v1471 = vunpack.c.l.b16 %v1375
      %v1472 = vunpack.c.l.b16 %v1376
      %v1473 = vunpack.c.l.b16 %v1377
      %v1474 = vunpack.c.l.b16 %v1378
      %v1475 = vunpack.c.l.b16 %v1379
      %v1476 = vunpack.c.l.b16 %v1380
      %v1477 = vunpack.c.l.b16 %v1381
      %v1478 = vunpack.c.l.b16 %v1382
      %v1479 = vunpack.c.l.b16 %v1383
      %v1480 = vunpack.c.l.b16 %v1384
      %v1481 = vunpack.c.l.b16 %v1385
      %v1482 = vunpack.c.l.b16 %v1386
      %v1483 = vunpack.c.l.b16 %v1387
      %v1484 = vunpack.c.l.b16 %v1388
      %v1485 = vunpack.c.l.b16 %v1389
      %v1486 = vunpack.c.l.b16 %v1390
      %v1487 = vunpack.c.l.b16 %v1391
      %v1488 = vunpack.c.l.b16 %v1392
      %v1489 = vpack.c.b16 %v1442, %v1441
      %v1490 = vpack.c.b16 %v1444, %v1443
      %v1491 = vpack.c.b16 %v1446, %v1445
      %v1492 = vpack.c.b16 %v1448, %v1447
      %v1493 = vpack.c.b16 %v1450, %v1449
      %v1494 = vpack.c.b16 %v1452, %v1451
      %v1495 = vpack.c.b16 %v1454, %v1453
      %v1496 = vpack.c.b16 %v1456, %v1455
      %v1497 = vpack.c.b16 %v1458, %v1457
      %v1498 = vpack.c.b16 %v1460, %v1459
      %v1499 = vpack.c.b16 %v1462, %v1461
      %v1500 = vpack.c.b16 %v1464, %v1463
      %v1501 = vpack.c.b16 %v1466, %v1465
      %v1502 = vpack.c.b16 %v1468, %v1467
      %v1503 = vpack.c.b16 %v1470, %v1469
      %v1504 = vpack.c.b16 %v1472, %v1471
      %v1505 = vpack.c.b16 %v1474, %v1473
      %v1506 = vpack.c.b16 %v1476, %v1475
      %v1507 = vpack.c.b16 %v1478, %v1477
      %v1508 = vpack.c.b16 %v1480, %v1479
      %v1509 = vpack.c.b16 %v1482, %v1481
      %v1510 = vpack.c.b16 %v1484, %v1483
      %v1511 = vpack.c.b16 %v1486, %v1485
      %v1512 = vpack.c.b16 %v1488, %v1487
      %1537 = vmatprep.subr.bf16.mxu0 0
      %1538 = vmatpush1.bf16.msra.mxu0 %v1489
      %1539 = vmatprep.subr.bf16.mxu0 0
      %1540 = vmatpush1.bf16.msra.mxu0 %v1490
      %1541 = vmatprep.subr.bf16.mxu0 0
      %1542 = vmatpush1.bf16.msra.mxu0 %v1491
      %1543 = vmatprep.subr.bf16.mxu0 0
      %1544 = vmatpush1.bf16.msra.mxu0 %v1492
      %1545 = vmatprep.subr.bf16.mxu0 0
      %1546 = vmatpush1.bf16.msra.mxu0 %v1493
      %1547 = vmatprep.subr.bf16.mxu0 0
      %1548 = vmatpush1.bf16.msra.mxu0 %v1494
      %1549 = vmatprep.subr.bf16.mxu0 0
      %1550 = vmatpush1.bf16.msra.mxu0 %v1495
      %1551 = vmatprep.subr.bf16.mxu0 0
      %1552 = vmatpush1.bf16.msra.mxu0 %v1496
      %1553 = vmatprep.subr.bf16.mxu0 0
      %1554 = vmatpush1.bf16.msra.mxu0 %v1497
      %1555 = vmatprep.subr.bf16.mxu0 0
      %1556 = vmatpush1.bf16.msra.mxu0 %v1498
      %1557 = vmatprep.subr.bf16.mxu0 0
      %1558 = vmatpush1.bf16.msra.mxu0 %v1499
      %1559 = vmatprep.subr.bf16.mxu0 0
      %1560 = vmatpush1.bf16.msra.mxu0 %v1500
      %1561 = vmatprep.subr.bf16.mxu0 0
      %1562 = vmatpush1.bf16.msra.mxu0 %v1501
      %1563 = vmatprep.subr.bf16.mxu0 0
      %1564 = vmatpush1.bf16.msra.mxu0 %v1502
      %1565 = vmatprep.subr.bf16.mxu0 0
      %1566 = vmatpush1.bf16.msra.mxu0 %v1503
      %1567 = vmatprep.subr.bf16.mxu0 0
      %1568 = vmatpush1.bf16.msra.mxu0 %v1504
      %1569 = vmatprep.mubr.bf16.mxu0 %v516
      %1570 = vmatmul.mubr.bf16.gmra.mrb[0].mxu0 %v681
      %v1571 = vpop.f32.mrb[0].mxu0
      %v1572 = vadd.f32 0.0, %v1571
      %v1573 = vpop.f32.mrb[0].mxu0
      %v1574 = vpop.f32.mrb[0].mxu0
      %v1575 = vadd.f32 0.0, %v1574
      %v1576 = vpop.f32.mrb[0].mxu0
      %1577 = vmatprep.mubr.bf16.mxu0 %v517
      %1578 = vmatmul.mubr.bf16.gmra.mrb[0].mxu0 %v682
      %v1579 = vpop.f32.mrb[0].mxu0
      %v1580 = vadd.f32 0.0, %v1579
      %v1581 = vpop.f32.mrb[0].mxu0
      %v1582 = vpop.f32.mrb[0].mxu0
      %v1583 = vadd.f32 0.0, %v1582
      %v1584 = vpop.f32.mrb[0].mxu0
      %1585 = vmatprep.mubr.bf16.mxu0 %v518
      %1586 = vmatmul.mubr.bf16.gmra.mrb[0].mxu0 %v683
      %v1587 = vpop.f32.mrb[0].mxu0
      %v1588 = vadd.f32 0.0, %v1587
      %v1589 = vpop.f32.mrb[0].mxu0
      %v1590 = vpop.f32.mrb[0].mxu0
      %v1591 = vadd.f32 0.0, %v1590
      %v1592 = vpop.f32.mrb[0].mxu0
      %1593 = vmatprep.mubr.bf16.mxu0 %v519
      %1594 = vmatmul.mubr.bf16.gmra.mrb[0].mxu0 %v684
      %v1595 = vpop.f32.mrb[0].mxu0
      %v1596 = vadd.f32 0.0, %v1595
      %v1597 = vpop.f32.mrb[0].mxu0
      %v1598 = vpop.f32.mrb[0].mxu0
      %v1599 = vadd.f32 0.0, %v1598
      %v1600 = vpop.f32.mrb[0].mxu0
      %1601 = vmatprep.mubr.bf16.mxu0 %v520
      %1602 = vmatmul.mubr.bf16.gmra.mrb[0].mxu0 %v685
      %v1603 = vpop.f32.mrb[0].mxu0
      %v1604 = vadd.f32 0.0, %v1603
      %v1605 = vpop.f32.mrb[0].mxu0
      %v1606 = vpop.f32.mrb[0].mxu0
      %v1607 = vadd.f32 0.0, %v1606
      %v1608 = vpop.f32.mrb[0].mxu0
      %1609 = vmatprep.mubr.bf16.mxu0 %v521
      %1610 = vmatmul.mubr.bf16.gmra.mrb[0].mxu0 %v686
      %v1611 = vpop.f32.mrb[0].mxu0
      %v1612 = vadd.f32 0.0, %v1611
      %v1613 = vpop.f32.mrb[0].mxu0
      %v1614 = vpop.f32.mrb[0].mxu0
      %v1615 = vadd.f32 0.0, %v1614
      %v1616 = vpop.f32.mrb[0].mxu0
      %1617 = vmatprep.mubr.bf16.mxu0 %v522
      %1618 = vmatmul.mubr.bf16.gmra.mrb[0].mxu0 %v687
      %v1619 = vpop.f32.mrb[0].mxu0
      %v1620 = vadd.f32 0.0, %v1619
      %v1621 = vpop.f32.mrb[0].mxu0
      %v1622 = vpop.f32.mrb[0].mxu0
      %v1623 = vadd.f32 0.0, %v1622
      %v1624 = vpop.f32.mrb[0].mxu0
      %1625 = vmatprep.mubr.bf16.mxu0 %v523
      %1626 = vmatmul.mubr.bf16.gmra.mrb[0].mxu0 %v688
      %v1627 = vpop.f32.mrb[0].mxu0
      %v1628 = vadd.f32 0.0, %v1627
      %v1629 = vpop.f32.mrb[0].mxu0
      %v1630 = vpop.f32.mrb[0].mxu0
      %v1631 = vadd.f32 0.0, %v1630
      %v1632 = vpop.f32.mrb[0].mxu0
      %1633 = vmatprep.mubr.bf16.mxu0 %v524
      %1634 = vmatmul.mubr.bf16.gmra.mrb[0].mxu0 %v689
      %v1635 = vpop.f32.mrb[0].mxu0
      %v1636 = vadd.f32 0.0, %v1635
      %v1637 = vpop.f32.mrb[0].mxu0
      %v1638 = vpop.f32.mrb[0].mxu0
      %v1639 = vadd.f32 0.0, %v1638
      %v1640 = vpop.f32.mrb[0].mxu0
      %1641 = vmatprep.mubr.bf16.mxu0 %v525
      %1642 = vmatmul.mubr.bf16.gmra.mrb[0].mxu0 %v690
      %v1643 = vpop.f32.mrb[0].mxu0
      %v1644 = vadd.f32 0.0, %v1643
      %v1645 = vpop.f32.mrb[0].mxu0
      %v1646 = vpop.f32.mrb[0].mxu0
      %v1647 = vadd.f32 0.0, %v1646
      %v1648 = vpop.f32.mrb[0].mxu0
      %1649 = vmatprep.mubr.bf16.mxu0 %v526
      %1650 = vmatmul.mubr.bf16.gmra.mrb[0].mxu0 %v691
      %v1651 = vpop.f32.mrb[0].mxu0
      %v1652 = vadd.f32 0.0, %v1651
      %v1653 = vpop.f32.mrb[0].mxu0
      %v1654 = vpop.f32.mrb[0].mxu0
      %v1655 = vadd.f32 0.0, %v1654
      %v1656 = vpop.f32.mrb[0].mxu0
      %1657 = vmatprep.mubr.bf16.mxu0 %v527
      %1658 = vmatmul.mubr.bf16.gmra.mrb[0].mxu0 %v692
      %v1659 = vpop.f32.mrb[0].mxu0
      %v1660 = vadd.f32 0.0, %v1659
      %v1661 = vpop.f32.mrb[0].mxu0
      %v1662 = vpop.f32.mrb[0].mxu0
      %v1663 = vadd.f32 0.0, %v1662
      %v1664 = vpop.f32.mrb[0].mxu0
      %1665 = vmatprep.mubr.bf16.mxu0 %v528
      %1666 = vmatmul.mubr.bf16.gmra.mrb[0].mxu0 %v693
      %v1667 = vpop.f32.mrb[0].mxu0
      %v1668 = vadd.f32 0.0, %v1667
      %v1669 = vpop.f32.mrb[0].mxu0
      %v1670 = vpop.f32.mrb[0].mxu0
      %v1671 = vadd.f32 0.0, %v1670
      %v1672 = vpop.f32.mrb[0].mxu0
      %1673 = vmatprep.mubr.bf16.mxu0 %v529
      %1674 = vmatmul.mubr.bf16.gmra.mrb[0].mxu0 %v694
      %v1675 = vpop.f32.mrb[0].mxu0
      %v1676 = vadd.f32 0.0, %v1675
      %v1677 = vpop.f32.mrb[0].mxu0
      %v1678 = vpop.f32.mrb[0].mxu0
      %v1679 = vadd.f32 0.0, %v1678
      %v1680 = vpop.f32.mrb[0].mxu0
      %1681 = vmatprep.mubr.bf16.mxu0 %v530
      %1682 = vmatmul.mubr.bf16.gmra.mrb[0].mxu0 %v695
      %v1683 = vpop.f32.mrb[0].mxu0
      %v1684 = vadd.f32 0.0, %v1683
      %v1685 = vpop.f32.mrb[0].mxu0
      %v1686 = vpop.f32.mrb[0].mxu0
      %v1687 = vadd.f32 0.0, %v1686
      %v1688 = vpop.f32.mrb[0].mxu0
      %1689 = vmatprep.mubr.bf16.mxu0 %v531
      %1690 = vmatmul.mubr.bf16.gmra.mrb[0].mxu0 %v696
      %v1691 = vpop.f32.mrb[0].mxu0
      %v1692 = vadd.f32 0.0, %v1691
      %v1693 = vpop.f32.mrb[0].mxu0
      %v1694 = vpop.f32.mrb[0].mxu0
      %v1695 = vadd.f32 0.0, %v1694
      %v1696 = vpop.f32.mrb[0].mxu0
      %1697 = vdwg.mxu0
      %1698 = vmatprep.subr.bf16.mxu0 0
      %1699 = vmatpush1.bf16.msra.mxu0 %v1505
      %1700 = vmatprep.subr.bf16.mxu0 0
      %1701 = vmatpush1.bf16.msra.mxu0 %v1506
      %1702 = vmatprep.subr.bf16.mxu0 0
      %1703 = vmatpush1.bf16.msra.mxu0 %v1507
      %1704 = vmatprep.subr.bf16.mxu0 0
      %1705 = vmatpush1.bf16.msra.mxu0 %v1508
      %1706 = vmatprep.subr.bf16.mxu0 0
      %1707 = vmatpush1.bf16.msra.mxu0 %v1509
      %1708 = vmatprep.subr.bf16.mxu0 0
      %1709 = vmatpush1.bf16.msra.mxu0 %v1510
      %1710 = vmatprep.subr.bf16.mxu0 0
      %1711 = vmatpush1.bf16.msra.mxu0 %v1511
      %1712 = vmatprep.subr.bf16.mxu0 0
      %1713 = vmatpush1.bf16.msra.mxu0 %v1512
      %1714 = vmatprep.subr.bf16.mxu0 0
      %1715 = vmatpush1.bf16.msra.mxu0 0
      %1716 = vmatprep.subr.bf16.mxu0 0
      %1717 = vmatpush1.bf16.msra.mxu0 0
      %1718 = vmatprep.subr.bf16.mxu0 0
      %1719 = vmatpush1.bf16.msra.mxu0 0
      %1720 = vmatprep.subr.bf16.mxu0 0
      %1721 = vmatpush1.bf16.msra.mxu0 0
      %1722 = vmatprep.subr.bf16.mxu0 0
      %1723 = vmatpush1.bf16.msra.mxu0 0
      %1724 = vmatprep.subr.bf16.mxu0 0
      %1725 = vmatpush1.bf16.msra.mxu0 0
      %1726 = vmatprep.subr.bf16.mxu0 0
      %1727 = vmatpush1.bf16.msra.mxu0 0
      %1728 = vmatprep.subr.bf16.mxu0 0
      %1729 = vmatpush1.bf16.msra.mxu0 0
      %1730 = vmatprep.mubr.bf16.mxu0 0
      %1731 = vmatmul.mubr.bf16.gmra.mrb[0].mxu0 %v756
      %v1732 = vpop.f32.mrb[0].mxu0
      %v1733 = vadd.f32 %v1572, %v1732
      %v1734 = vpop.f32.mrb[0].mxu0
      %v1735 = vpop.f32.mrb[0].mxu0
      %v1736 = vadd.f32 %v1575, %v1735
      %v1737 = vpop.f32.mrb[0].mxu0
      %1738 = vmatprep.mubr.bf16.mxu0 0
      %1739 = vmatmul.mubr.bf16.gmra.mrb[0].mxu0 %v757
      %v1740 = vpop.f32.mrb[0].mxu0
      %v1741 = vadd.f32 %v1580, %v1740
      %v1742 = vpop.f32.mrb[0].mxu0
      %v1743 = vpop.f32.mrb[0].mxu0
      %v1744 = vadd.f32 %v1583, %v1743
      %v1745 = vpop.f32.mrb[0].mxu0
      %1746 = vmatprep.mubr.bf16.mxu0 0
      %1747 = vmatmul.mubr.bf16.gmra.mrb[0].mxu0 %v758
      %v1748 = vpop.f32.mrb[0].mxu0
      %v1749 = vadd.f32 %v1588, %v1748
      %v1750 = vpop.f32.mrb[0].mxu0
      %v1751 = vpop.f32.mrb[0].mxu0
      %v1752 = vadd.f32 %v1591, %v1751
      %v1753 = vpop.f32.mrb[0].mxu0
      %1754 = vmatprep.mubr.bf16.mxu0 0
      %1755 = vmatmul.mubr.bf16.gmra.mrb[0].mxu0 %v759
      %v1756 = vpop.f32.mrb[0].mxu0
      %v1757 = vadd.f32 %v1596, %v1756
      %v1758 = vpop.f32.mrb[0].mxu0
      %v1759 = vpop.f32.mrb[0].mxu0
      %v1760 = vadd.f32 %v1599, %v1759
      %v1761 = vpop.f32.mrb[0].mxu0
      %1762 = vmatprep.mubr.bf16.mxu0 0
      %1763 = vmatmul.mubr.bf16.gmra.mrb[0].mxu0 %v760
      %v1764 = vpop.f32.mrb[0].mxu0
      %v1765 = vadd.f32 %v1604, %v1764
      %v1766 = vpop.f32.mrb[0].mxu0
      %v1767 = vpop.f32.mrb[0].mxu0
      %v1768 = vadd.f32 %v1607, %v1767
      %v1769 = vpop.f32.mrb[0].mxu0
      %1770 = vmatprep.mubr.bf16.mxu0 0
      %1771 = vmatmul.mubr.bf16.gmra.mrb[0].mxu0 %v761
      %v1772 = vpop.f32.mrb[0].mxu0
      %v1773 = vadd.f32 %v1612, %v1772
      %v1774 = vpop.f32.mrb[0].mxu0
      %v1775 = vpop.f32.mrb[0].mxu0
      %v1776 = vadd.f32 %v1615, %v1775
      %v1777 = vpop.f32.mrb[0].mxu0
      %1778 = vmatprep.mubr.bf16.mxu0 0
      %1779 = vmatmul.mubr.bf16.gmra.mrb[0].mxu0 %v762
      %v1780 = vpop.f32.mrb[0].mxu0
      %v1781 = vadd.f32 %v1620, %v1780
      %v1782 = vpop.f32.mrb[0].mxu0
      %v1783 = vpop.f32.mrb[0].mxu0
      %v1784 = vadd.f32 %v1623, %v1783
      %v1785 = vpop.f32.mrb[0].mxu0
      %1786 = vmatprep.mubr.bf16.mxu0 0
      %1787 = vmatmul.mubr.bf16.gmra.mrb[0].mxu0 %v763
      %v1788 = vpop.f32.mrb[0].mxu0
      %v1789 = vadd.f32 %v1628, %v1788
      %v1790 = vpop.f32.mrb[0].mxu0
      %v1791 = vpop.f32.mrb[0].mxu0
      %v1792 = vadd.f32 %v1631, %v1791
      %v1793 = vpop.f32.mrb[0].mxu0
      %1794 = vmatprep.mubr.bf16.mxu0 0
      %1795 = vmatmul.mubr.bf16.gmra.mrb[0].mxu0 %v764
      %v1796 = vpop.f32.mrb[0].mxu0
      %v1797 = vadd.f32 %v1636, %v1796
      %v1798 = vpop.f32.mrb[0].mxu0
      %v1799 = vpop.f32.mrb[0].mxu0
      %v1800 = vadd.f32 %v1639, %v1799
      %v1801 = vpop.f32.mrb[0].mxu0
      %1802 = vmatprep.mubr.bf16.mxu0 0
      %1803 = vmatmul.mubr.bf16.gmra.mrb[0].mxu0 %v765
      %v1804 = vpop.f32.mrb[0].mxu0
      %v1805 = vadd.f32 %v1644, %v1804
      %v1806 = vpop.f32.mrb[0].mxu0
      %v1807 = vpop.f32.mrb[0].mxu0
      %v1808 = vadd.f32 %v1647, %v1807
      %v1809 = vpop.f32.mrb[0].mxu0
      %1810 = vmatprep.mubr.bf16.mxu0 0
      %1811 = vmatmul.mubr.bf16.gmra.mrb[0].mxu0 %v766
      %v1812 = vpop.f32.mrb[0].mxu0
      %v1813 = vadd.f32 %v1652, %v1812
      %v1814 = vpop.f32.mrb[0].mxu0
      %v1815 = vpop.f32.mrb[0].mxu0
      %v1816 = vadd.f32 %v1655, %v1815
      %v1817 = vpop.f32.mrb[0].mxu0
      %1818 = vmatprep.mubr.bf16.mxu0 0
      %1819 = vmatmul.mubr.bf16.gmra.mrb[0].mxu0 %v767
      %v1820 = vpop.f32.mrb[0].mxu0
      %v1821 = vadd.f32 %v1660, %v1820
      %v1822 = vpop.f32.mrb[0].mxu0
      %v1823 = vpop.f32.mrb[0].mxu0
      %v1824 = vadd.f32 %v1663, %v1823
      %v1825 = vpop.f32.mrb[0].mxu0
      %1826 = vmatprep.mubr.bf16.mxu0 0
      %1827 = vmatmul.mubr.bf16.gmra.mrb[0].mxu0 %v768
      %v1828 = vpop.f32.mrb[0].mxu0
      %v1829 = vadd.f32 %v1668, %v1828
      %v1830 = vpop.f32.mrb[0].mxu0
      %v1831 = vpop.f32.mrb[0].mxu0
      %v1832 = vadd.f32 %v1671, %v1831
      %v1833 = vpop.f32.mrb[0].mxu0
      %1834 = vmatprep.mubr.bf16.mxu0 0
      %1835 = vmatmul.mubr.bf16.gmra.mrb[0].mxu0 %v769
      %v1836 = vpop.f32.mrb[0].mxu0
      %v1837 = vadd.f32 %v1676, %v1836
      %v1838 = vpop.f32.mrb[0].mxu0
      %v1839 = vpop.f32.mrb[0].mxu0
      %v1840 = vadd.f32 %v1679, %v1839
      %v1841 = vpop.f32.mrb[0].mxu0
      %1842 = vmatprep.mubr.bf16.mxu0 0
      %1843 = vmatmul.mubr.bf16.gmra.mrb[0].mxu0 %v770
      %v1844 = vpop.f32.mrb[0].mxu0
      %v1845 = vadd.f32 %v1684, %v1844
      %v1846 = vpop.f32.mrb[0].mxu0
      %v1847 = vpop.f32.mrb[0].mxu0
      %v1848 = vadd.f32 %v1687, %v1847
      %v1849 = vpop.f32.mrb[0].mxu0
      %1850 = vmatprep.mubr.bf16.mxu0 0
      %1851 = vmatmul.mubr.bf16.gmra.mrb[0].mxu0 %v771
      %v1852 = vpop.f32.mrb[0].mxu0
      %v1853 = vadd.f32 %v1692, %v1852
      %v1854 = vpop.f32.mrb[0].mxu0
      %v1855 = vpop.f32.mrb[0].mxu0
      %v1856 = vadd.f32 %v1695, %v1855
      %v1857 = vpop.f32.mrb[0].mxu0
      %1858 = vdwg.mxu0
      %v1859 = vadd.f32 %v1312, %v1733
      %v1860 = vadd.f32 %v1313, %v1736
      %v1861 = vadd.f32 %v1314, %v1741
      %v1862 = vadd.f32 %v1315, %v1744
      %v1863 = vadd.f32 %v1316, %v1749
      %v1864 = vadd.f32 %v1317, %v1752
      %v1865 = vadd.f32 %v1318, %v1757
      %v1866 = vadd.f32 %v1319, %v1760
      %v1867 = vadd.f32 %v1320, %v1765
      %v1868 = vadd.f32 %v1321, %v1768
      %v1869 = vadd.f32 %v1322, %v1773
      %v1870 = vadd.f32 %v1323, %v1776
      %v1871 = vadd.f32 %v1324, %v1781
      %v1872 = vadd.f32 %v1325, %v1784
      %v1873 = vadd.f32 %v1326, %v1789
      %v1874 = vadd.f32 %v1327, %v1792
      %v1875 = vadd.f32 %v1328, %v1797
      %v1876 = vadd.f32 %v1329, %v1800
      %v1877 = vadd.f32 %v1330, %v1805
      %v1878 = vadd.f32 %v1331, %v1808
      %v1879 = vadd.f32 %v1332, %v1813
      %v1880 = vadd.f32 %v1333, %v1816
      %v1881 = vadd.f32 %v1334, %v1821
      %v1882 = vadd.f32 %v1335, %v1824
      %v1883 = vadd.f32 %v1336, %v1829
      %v1884 = vadd.f32 %v1337, %v1832
      %v1885 = vadd.f32 %v1338, %v1837
      %v1886 = vadd.f32 %v1339, %v1840
      %v1887 = vadd.f32 %v1340, %v1845
      %v1888 = vadd.f32 %v1341, %v1848
      %v1889 = vadd.f32 %v1342, %v1853
      %v1890 = vadd.f32 %v1343, %v1856
      %s1891 = scalar_lea.vmem %s3, 384
      %v1892 = vld [vmem:[%s1891] sm:$0xf]
      %v1893 = vld [vmem:[%s1891 + $0x4] sm:$0xf]
      %v1894 = vld [vmem:[%s1891 + $0x8] sm:$0xf]
      %v1895 = vld [vmem:[%s1891 + $0xc] sm:$0xf]
      %v1896 = vld [vmem:[%s1891 + $0x10] sm:$0xf]
      %v1897 = vld [vmem:[%s1891 + $0x14] sm:$0xf]
      %v1898 = vld [vmem:[%s1891 + $0x18] sm:$0xf]
      %v1899 = vld [vmem:[%s1891 + $0x1c] sm:$0xf]
      %v1900 = vld [vmem:[%s1891 + $0x20] sm:$0xf]
      %v1901 = vld [vmem:[%s1891 + $0x24] sm:$0xf]
      %v1902 = vld [vmem:[%s1891 + $0x28] sm:$0xf]
      %v1903 = vld [vmem:[%s1891 + $0x2c] sm:$0xf]
      %v1904 = vld [vmem:[%s1891 + $0x30] sm:$0xf]
      %v1905 = vld [vmem:[%s1891 + $0x34] sm:$0xf]
      %v1906 = vld [vmem:[%s1891 + $0x38] sm:$0xf]
      %v1907 = vld [vmem:[%s1891 + $0x3c] sm:$0xf]
      %v1908 = vld [vmem:[%s1891 + $0x40] sm:$0xf]
      %v1909 = vld [vmem:[%s1891 + $0x44] sm:$0xf]
      %v1910 = vld [vmem:[%s1891 + $0x48] sm:$0xf]
      %v1911 = vld [vmem:[%s1891 + $0x4c] sm:$0xf]
      %v1912 = vld [vmem:[%s1891 + $0x50] sm:$0xf]
      %v1913 = vld [vmem:[%s1891 + $0x54] sm:$0xf]
      %v1914 = vld [vmem:[%s1891 + $0x58] sm:$0xf]
      %v1915 = vld [vmem:[%s1891 + $0x5c] sm:$0xf]
      %v1916 = vld [vmem:[%s1891 + $0x60] sm:$0xf]
      %v1917 = vld [vmem:[%s1891 + $0x64] sm:$0xf]
      %v1918 = vld [vmem:[%s1891 + $0x68] sm:$0xf]
      %v1919 = vld [vmem:[%s1891 + $0x6c] sm:$0xf]
      %v1920 = vld [vmem:[%s1891 + $0x70] sm:$0xf]
      %v1921 = vld [vmem:[%s1891 + $0x74] sm:$0xf]
      %v1922 = vld [vmem:[%s1891 + $0x78] sm:$0xf]
      %v1923 = vld [vmem:[%s1891 + $0x7c] sm:$0xf]
      %v1924 = vld [vmem:[%s1891 + $0x80] sm:$0xf]
      %v1925 = vld [vmem:[%s1891 + $0x84] sm:$0xf]
      %v1926 = vld [vmem:[%s1891 + $0x88] sm:$0xf]
      %v1927 = vld [vmem:[%s1891 + $0x8c] sm:$0xf]
      %v1928 = vld [vmem:[%s1891 + $0x90] sm:$0xf]
      %v1929 = vld [vmem:[%s1891 + $0x94] sm:$0xf]
      %v1930 = vld [vmem:[%s1891 + $0x98] sm:$0xf]
      %v1931 = vld [vmem:[%s1891 + $0x9c] sm:$0xf]
      %v1932 = vld [vmem:[%s1891 + $0xa0] sm:$0xf]
      %v1933 = vld [vmem:[%s1891 + $0xa4] sm:$0xf]
      %v1934 = vld [vmem:[%s1891 + $0xa8] sm:$0xf]
      %v1935 = vld [vmem:[%s1891 + $0xac] sm:$0xf]
      %v1936 = vld [vmem:[%s1891 + $0xb0] sm:$0xf]
      %v1937 = vld [vmem:[%s1891 + $0xb4] sm:$0xf]
      %v1938 = vld [vmem:[%s1891 + $0xb8] sm:$0xf]
      %v1939 = vld [vmem:[%s1891 + $0xbc] sm:$0xf]
      %v1988 = vunpack.c.l.b16 %v1892
      %v1989 = vunpack.c.l.b16 %v1893
      %v1990 = vunpack.c.l.b16 %v1894
      %v1991 = vunpack.c.l.b16 %v1895
      %v1992 = vunpack.c.l.b16 %v1896
      %v1993 = vunpack.c.l.b16 %v1897
      %v1994 = vunpack.c.l.b16 %v1898
      %v1995 = vunpack.c.l.b16 %v1899
      %v1996 = vunpack.c.l.b16 %v1900
      %v1997 = vunpack.c.l.b16 %v1901
      %v1998 = vunpack.c.l.b16 %v1902
      %v1999 = vunpack.c.l.b16 %v1903
      %v2000 = vunpack.c.l.b16 %v1904
      %v2001 = vunpack.c.l.b16 %v1905
      %v2002 = vunpack.c.l.b16 %v1906
      %v2003 = vunpack.c.l.b16 %v1907
      %v2004 = vunpack.c.l.b16 %v1908
      %v2005 = vunpack.c.l.b16 %v1909
      %v2006 = vunpack.c.l.b16 %v1910
      %v2007 = vunpack.c.l.b16 %v1911
      %v2008 = vunpack.c.l.b16 %v1912
      %v2009 = vunpack.c.l.b16 %v1913
      %v2010 = vunpack.c.l.b16 %v1914
      %v2011 = vunpack.c.l.b16 %v1915
      %v2012 = vunpack.c.l.b16 %v1916
      %v2013 = vunpack.c.l.b16 %v1917
      %v2014 = vunpack.c.l.b16 %v1918
      %v2015 = vunpack.c.l.b16 %v1919
      %v2016 = vunpack.c.l.b16 %v1920
      %v2017 = vunpack.c.l.b16 %v1921
      %v2018 = vunpack.c.l.b16 %v1922
      %v2019 = vunpack.c.l.b16 %v1923
      %v2020 = vunpack.c.l.b16 %v1924
      %v2021 = vunpack.c.l.b16 %v1925
      %v2022 = vunpack.c.l.b16 %v1926
      %v2023 = vunpack.c.l.b16 %v1927
      %v2024 = vunpack.c.l.b16 %v1928
      %v2025 = vunpack.c.l.b16 %v1929
      %v2026 = vunpack.c.l.b16 %v1930
      %v2027 = vunpack.c.l.b16 %v1931
      %v2028 = vunpack.c.l.b16 %v1932
      %v2029 = vunpack.c.l.b16 %v1933
      %v2030 = vunpack.c.l.b16 %v1934
      %v2031 = vunpack.c.l.b16 %v1935
      %v2032 = vunpack.c.l.b16 %v1936
      %v2033 = vunpack.c.l.b16 %v1937
      %v2034 = vunpack.c.l.b16 %v1938
      %v2035 = vunpack.c.l.b16 %v1939
      %v2036 = vpack.c.b16 %v1989, %v1988
      %v2037 = vpack.c.b16 %v1991, %v1990
      %v2038 = vpack.c.b16 %v1993, %v1992
      %v2039 = vpack.c.b16 %v1995, %v1994
      %v2040 = vpack.c.b16 %v1997, %v1996
      %v2041 = vpack.c.b16 %v1999, %v1998
      %v2042 = vpack.c.b16 %v2001, %v2000
      %v2043 = vpack.c.b16 %v2003, %v2002
      %v2044 = vpack.c.b16 %v2005, %v2004
      %v2045 = vpack.c.b16 %v2007, %v2006
      %v2046 = vpack.c.b16 %v2009, %v2008
      %v2047 = vpack.c.b16 %v2011, %v2010
      %v2048 = vpack.c.b16 %v2013, %v2012
      %v2049 = vpack.c.b16 %v2015, %v2014
      %v2050 = vpack.c.b16 %v2017, %v2016
      %v2051 = vpack.c.b16 %v2019, %v2018
      %v2052 = vpack.c.b16 %v2021, %v2020
      %v2053 = vpack.c.b16 %v2023, %v2022
      %v2054 = vpack.c.b16 %v2025, %v2024
      %v2055 = vpack.c.b16 %v2027, %v2026
      %v2056 = vpack.c.b16 %v2029, %v2028
      %v2057 = vpack.c.b16 %v2031, %v2030
      %v2058 = vpack.c.b16 %v2033, %v2032
      %v2059 = vpack.c.b16 %v2035, %v2034
      %2084 = vmatprep.subr.bf16.mxu0 0
      %2085 = vmatpush1.bf16.msra.mxu0 %v2036
      %2086 = vmatprep.subr.bf16.mxu0 0
      %2087 = vmatpush1.bf16.msra.mxu0 %v2037
      %2088 = vmatprep.subr.bf16.mxu0 0
      %2089 = vmatpush1.bf16.msra.mxu0 %v2038
      %2090 = vmatprep.subr.bf16.mxu0 0
      %2091 = vmatpush1.bf16.msra.mxu0 %v2039
      %2092 = vmatprep.subr.bf16.mxu0 0
      %2093 = vmatpush1.bf16.msra.mxu0 %v2040
      %2094 = vmatprep.subr.bf16.mxu0 0
      %2095 = vmatpush1.bf16.msra.mxu0 %v2041
      %2096 = vmatprep.subr.bf16.mxu0 0
      %2097 = vmatpush1.bf16.msra.mxu0 %v2042
      %2098 = vmatprep.subr.bf16.mxu0 0
      %2099 = vmatpush1.bf16.msra.mxu0 %v2043
      %2100 = vmatprep.subr.bf16.mxu0 0
      %2101 = vmatpush1.bf16.msra.mxu0 %v2044
      %2102 = vmatprep.subr.bf16.mxu0 0
      %2103 = vmatpush1.bf16.msra.mxu0 %v2045
      %2104 = vmatprep.subr.bf16.mxu0 0
      %2105 = vmatpush1.bf16.msra.mxu0 %v2046
      %2106 = vmatprep.subr.bf16.mxu0 0
      %2107 = vmatpush1.bf16.msra.mxu0 %v2047
      %2108 = vmatprep.subr.bf16.mxu0 0
      %2109 = vmatpush1.bf16.msra.mxu0 %v2048
      %2110 = vmatprep.subr.bf16.mxu0 0
      %2111 = vmatpush1.bf16.msra.mxu0 %v2049
      %2112 = vmatprep.subr.bf16.mxu0 0
      %2113 = vmatpush1.bf16.msra.mxu0 %v2050
      %2114 = vmatprep.subr.bf16.mxu0 0
      %2115 = vmatpush1.bf16.msra.mxu0 %v2051
      %2116 = vmatprep.mubr.bf16.mxu0 %v517
      %2117 = vmatmul.mubr.bf16.gmra.mrb[0].mxu0 %v682
      %v2118 = vpop.f32.mrb[0].mxu0
      %v2119 = vadd.f32 0.0, %v2118
      %v2120 = vpop.f32.mrb[0].mxu0
      %v2121 = vpop.f32.mrb[0].mxu0
      %v2122 = vadd.f32 0.0, %v2121
      %v2123 = vpop.f32.mrb[0].mxu0
      %2124 = vmatprep.mubr.bf16.mxu0 %v518
      %2125 = vmatmul.mubr.bf16.gmra.mrb[0].mxu0 %v683
      %v2126 = vpop.f32.mrb[0].mxu0
      %v2127 = vadd.f32 0.0, %v2126
      %v2128 = vpop.f32.mrb[0].mxu0
      %v2129 = vpop.f32.mrb[0].mxu0
      %v2130 = vadd.f32 0.0, %v2129
      %v2131 = vpop.f32.mrb[0].mxu0
      %2132 = vmatprep.mubr.bf16.mxu0 %v519
      %2133 = vmatmul.mubr.bf16.gmra.mrb[0].mxu0 %v684
      %v2134 = vpop.f32.mrb[0].mxu0
      %v2135 = vadd.f32 0.0, %v2134
      %v2136 = vpop.f32.mrb[0].mxu0
      %v2137 = vpop.f32.mrb[0].mxu0
      %v2138 = vadd.f32 0.0, %v2137
      %v2139 = vpop.f32.mrb[0].mxu0
      %2140 = vmatprep.mubr.bf16.mxu0 %v520
      %2141 = vmatmul.mubr.bf16.gmra.mrb[0].mxu0 %v685
      %v2142 = vpop.f32.mrb[0].mxu0
      %v2143 = vadd.f32 0.0, %v2142
      %v2144 = vpop.f32.mrb[0].mxu0
      %v2145 = vpop.f32.mrb[0].mxu0
      %v2146 = vadd.f32 0.0, %v2145
      %v2147 = vpop.f32.mrb[0].mxu0
      %2148 = vmatprep.mubr.bf16.mxu0 %v521
      %2149 = vmatmul.mubr.bf16.gmra.mrb[0].mxu0 %v686
      %v2150 = vpop.f32.mrb[0].mxu0
      %v2151 = vadd.f32 0.0, %v2150
      %v2152 = vpop.f32.mrb[0].mxu0
      %v2153 = vpop.f32.mrb[0].mxu0
      %v2154 = vadd.f32 0.0, %v2153
      %v2155 = vpop.f32.mrb[0].mxu0
      %2156 = vmatprep.mubr.bf16.mxu0 %v522
      %2157 = vmatmul.mubr.bf16.gmra.mrb[0].mxu0 %v687
      %v2158 = vpop.f32.mrb[0].mxu0
      %v2159 = vadd.f32 0.0, %v2158
      %v2160 = vpop.f32.mrb[0].mxu0
      %v2161 = vpop.f32.mrb[0].mxu0
      %v2162 = vadd.f32 0.0, %v2161
      %v2163 = vpop.f32.mrb[0].mxu0
      %2164 = vmatprep.mubr.bf16.mxu0 %v523
      %2165 = vmatmul.mubr.bf16.gmra.mrb[0].mxu0 %v688
      %v2166 = vpop.f32.mrb[0].mxu0
      %v2167 = vadd.f32 0.0, %v2166
      %v2168 = vpop.f32.mrb[0].mxu0
      %v2169 = vpop.f32.mrb[0].mxu0
      %v2170 = vadd.f32 0.0, %v2169
      %v2171 = vpop.f32.mrb[0].mxu0
      %2172 = vmatprep.mubr.bf16.mxu0 %v524
      %2173 = vmatmul.mubr.bf16.gmra.mrb[0].mxu0 %v689
      %v2174 = vpop.f32.mrb[0].mxu0
      %v2175 = vadd.f32 0.0, %v2174
      %v2176 = vpop.f32.mrb[0].mxu0
      %v2177 = vpop.f32.mrb[0].mxu0
      %v2178 = vadd.f32 0.0, %v2177
      %v2179 = vpop.f32.mrb[0].mxu0
      %2180 = vmatprep.mubr.bf16.mxu0 %v525
      %2181 = vmatmul.mubr.bf16.gmra.mrb[0].mxu0 %v690
      %v2182 = vpop.f32.mrb[0].mxu0
      %v2183 = vadd.f32 0.0, %v2182
      %v2184 = vpop.f32.mrb[0].mxu0
      %v2185 = vpop.f32.mrb[0].mxu0
      %v2186 = vadd.f32 0.0, %v2185
      %v2187 = vpop.f32.mrb[0].mxu0
      %2188 = vmatprep.mubr.bf16.mxu0 %v526
      %2189 = vmatmul.mubr.bf16.gmra.mrb[0].mxu0 %v691
      %v2190 = vpop.f32.mrb[0].mxu0
      %v2191 = vadd.f32 0.0, %v2190
      %v2192 = vpop.f32.mrb[0].mxu0
      %v2193 = vpop.f32.mrb[0].mxu0
      %v2194 = vadd.f32 0.0, %v2193
      %v2195 = vpop.f32.mrb[0].mxu0
      %2196 = vmatprep.mubr.bf16.mxu0 %v527
      %2197 = vmatmul.mubr.bf16.gmra.mrb[0].mxu0 %v692
      %v2198 = vpop.f32.mrb[0].mxu0
      %v2199 = vadd.f32 0.0, %v2198
      %v2200 = vpop.f32.mrb[0].mxu0
      %v2201 = vpop.f32.mrb[0].mxu0
      %v2202 = vadd.f32 0.0, %v2201
      %v2203 = vpop.f32.mrb[0].mxu0
      %2204 = vmatprep.mubr.bf16.mxu0 %v528
      %2205 = vmatmul.mubr.bf16.gmra.mrb[0].mxu0 %v693
      %v2206 = vpop.f32.mrb[0].mxu0
      %v2207 = vadd.f32 0.0, %v2206
      %v2208 = vpop.f32.mrb[0].mxu0
      %v2209 = vpop.f32.mrb[0].mxu0
      %v2210 = vadd.f32 0.0, %v2209
      %v2211 = vpop.f32.mrb[0].mxu0
      %2212 = vmatprep.mubr.bf16.mxu0 %v529
      %2213 = vmatmul.mubr.bf16.gmra.mrb[0].mxu0 %v694
      %v2214 = vpop.f32.mrb[0].mxu0
      %v2215 = vadd.f32 0.0, %v2214
      %v2216 = vpop.f32.mrb[0].mxu0
      %v2217 = vpop.f32.mrb[0].mxu0
      %v2218 = vadd.f32 0.0, %v2217
      %v2219 = vpop.f32.mrb[0].mxu0
      %2220 = vmatprep.mubr.bf16.mxu0 %v530
      %2221 = vmatmul.mubr.bf16.gmra.mrb[0].mxu0 %v695
      %v2222 = vpop.f32.mrb[0].mxu0
      %v2223 = vadd.f32 0.0, %v2222
      %v2224 = vpop.f32.mrb[0].mxu0
      %v2225 = vpop.f32.mrb[0].mxu0
      %v2226 = vadd.f32 0.0, %v2225
      %v2227 = vpop.f32.mrb[0].mxu0
      %2228 = vmatprep.mubr.bf16.mxu0 %v531
      %2229 = vmatmul.mubr.bf16.gmra.mrb[0].mxu0 %v696
      %v2230 = vpop.f32.mrb[0].mxu0
      %v2231 = vadd.f32 0.0, %v2230
      %v2232 = vpop.f32.mrb[0].mxu0
      %v2233 = vpop.f32.mrb[0].mxu0
      %v2234 = vadd.f32 0.0, %v2233
      %v2235 = vpop.f32.mrb[0].mxu0
      %2236 = vmatprep.mubr.bf16.mxu0 %v532
      %2237 = vmatmul.mubr.bf16.gmra.mrb[0].mxu0 %v697
      %v2238 = vpop.f32.mrb[0].mxu0
      %v2239 = vadd.f32 0.0, %v2238
      %v2240 = vpop.f32.mrb[0].mxu0
      %v2241 = vpop.f32.mrb[0].mxu0
      %v2242 = vadd.f32 0.0, %v2241
      %v2243 = vpop.f32.mrb[0].mxu0
      %2244 = vdwg.mxu0
      %2245 = vmatprep.subr.bf16.mxu0 0
      %2246 = vmatpush1.bf16.msra.mxu0 %v2052
      %2247 = vmatprep.subr.bf16.mxu0 0
      %2248 = vmatpush1.bf16.msra.mxu0 %v2053
      %2249 = vmatprep.subr.bf16.mxu0 0
      %2250 = vmatpush1.bf16.msra.mxu0 %v2054
      %2251 = vmatprep.subr.bf16.mxu0 0
      %2252 = vmatpush1.bf16.msra.mxu0 %v2055
      %2253 = vmatprep.subr.bf16.mxu0 0
      %2254 = vmatpush1.bf16.msra.mxu0 %v2056
      %2255 = vmatprep.subr.bf16.mxu0 0
      %2256 = vmatpush1.bf16.msra.mxu0 %v2057
      %2257 = vmatprep.subr.bf16.mxu0 0
      %2258 = vmatpush1.bf16.msra.mxu0 %v2058
      %2259 = vmatprep.subr.bf16.mxu0 0
      %2260 = vmatpush1.bf16.msra.mxu0 %v2059
      %2261 = vmatprep.subr.bf16.mxu0 0
      %2262 = vmatpush1.bf16.msra.mxu0 0
      %2263 = vmatprep.subr.bf16.mxu0 0
      %2264 = vmatpush1.bf16.msra.mxu0 0
      %2265 = vmatprep.subr.bf16.mxu0 0
      %2266 = vmatpush1.bf16.msra.mxu0 0
      %2267 = vmatprep.subr.bf16.mxu0 0
      %2268 = vmatpush1.bf16.msra.mxu0 0
      %2269 = vmatprep.subr.bf16.mxu0 0
      %2270 = vmatpush1.bf16.msra.mxu0 0
      %2271 = vmatprep.subr.bf16.mxu0 0
      %2272 = vmatpush1.bf16.msra.mxu0 0
      %2273 = vmatprep.subr.bf16.mxu0 0
      %2274 = vmatpush1.bf16.msra.mxu0 0
      %2275 = vmatprep.subr.bf16.mxu0 0
      %2276 = vmatpush1.bf16.msra.mxu0 0
      %2277 = vmatprep.mubr.bf16.mxu0 0
      %2278 = vmatmul.mubr.bf16.gmra.mrb[0].mxu0 %v757
      %v2279 = vpop.f32.mrb[0].mxu0
      %v2280 = vadd.f32 %v2119, %v2279
      %v2281 = vpop.f32.mrb[0].mxu0
      %v2282 = vpop.f32.mrb[0].mxu0
      %v2283 = vadd.f32 %v2122, %v2282
      %v2284 = vpop.f32.mrb[0].mxu0
      %2285 = vmatprep.mubr.bf16.mxu0 0
      %2286 = vmatmul.mubr.bf16.gmra.mrb[0].mxu0 %v758
      %v2287 = vpop.f32.mrb[0].mxu0
      %v2288 = vadd.f32 %v2127, %v2287
      %v2289 = vpop.f32.mrb[0].mxu0
      %v2290 = vpop.f32.mrb[0].mxu0
      %v2291 = vadd.f32 %v2130, %v2290
      %v2292 = vpop.f32.mrb[0].mxu0
      %2293 = vmatprep.mubr.bf16.mxu0 0
      %2294 = vmatmul.mubr.bf16.gmra.mrb[0].mxu0 %v759
      %v2295 = vpop.f32.mrb[0].mxu0
      %v2296 = vadd.f32 %v2135, %v2295
      %v2297 = vpop.f32.mrb[0].mxu0
      %v2298 = vpop.f32.mrb[0].mxu0
      %v2299 = vadd.f32 %v2138, %v2298
      %v2300 = vpop.f32.mrb[0].mxu0
      %2301 = vmatprep.mubr.bf16.mxu0 0
      %2302 = vmatmul.mubr.bf16.gmra.mrb[0].mxu0 %v760
      %v2303 = vpop.f32.mrb[0].mxu0
      %v2304 = vadd.f32 %v2143, %v2303
      %v2305 = vpop.f32.mrb[0].mxu0
      %v2306 = vpop.f32.mrb[0].mxu0
      %v2307 = vadd.f32 %v2146, %v2306
      %v2308 = vpop.f32.mrb[0].mxu0
      %2309 = vmatprep.mubr.bf16.mxu0 0
      %2310 = vmatmul.mubr.bf16.gmra.mrb[0].mxu0 %v761
      %v2311 = vpop.f32.mrb[0].mxu0
      %v2312 = vadd.f32 %v2151, %v2311
      %v2313 = vpop.f32.mrb[0].mxu0
      %v2314 = vpop.f32.mrb[0].mxu0
      %v2315 = vadd.f32 %v2154, %v2314
      %v2316 = vpop.f32.mrb[0].mxu0
      %2317 = vmatprep.mubr.bf16.mxu0 0
      %2318 = vmatmul.mubr.bf16.gmra.mrb[0].mxu0 %v762
      %v2319 = vpop.f32.mrb[0].mxu0
      %v2320 = vadd.f32 %v2159, %v2319
      %v2321 = vpop.f32.mrb[0].mxu0
      %v2322 = vpop.f32.mrb[0].mxu0
      %v2323 = vadd.f32 %v2162, %v2322
      %v2324 = vpop.f32.mrb[0].mxu0
      %2325 = vmatprep.mubr.bf16.mxu0 0
      %2326 = vmatmul.mubr.bf16.gmra.mrb[0].mxu0 %v763
      %v2327 = vpop.f32.mrb[0].mxu0
      %v2328 = vadd.f32 %v2167, %v2327
      %v2329 = vpop.f32.mrb[0].mxu0
      %v2330 = vpop.f32.mrb[0].mxu0
      %v2331 = vadd.f32 %v2170, %v2330
      %v2332 = vpop.f32.mrb[0].mxu0
      %2333 = vmatprep.mubr.bf16.mxu0 0
      %2334 = vmatmul.mubr.bf16.gmra.mrb[0].mxu0 %v764
      %v2335 = vpop.f32.mrb[0].mxu0
      %v2336 = vadd.f32 %v2175, %v2335
      %v2337 = vpop.f32.mrb[0].mxu0
      %v2338 = vpop.f32.mrb[0].mxu0
      %v2339 = vadd.f32 %v2178, %v2338
      %v2340 = vpop.f32.mrb[0].mxu0
      %2341 = vmatprep.mubr.bf16.mxu0 0
      %2342 = vmatmul.mubr.bf16.gmra.mrb[0].mxu0 %v765
      %v2343 = vpop.f32.mrb[0].mxu0
      %v2344 = vadd.f32 %v2183, %v2343
      %v2345 = vpop.f32.mrb[0].mxu0
      %v2346 = vpop.f32.mrb[0].mxu0
      %v2347 = vadd.f32 %v2186, %v2346
      %v2348 = vpop.f32.mrb[0].mxu0
      %2349 = vmatprep.mubr.bf16.mxu0 0
      %2350 = vmatmul.mubr.bf16.gmra.mrb[0].mxu0 %v766
      %v2351 = vpop.f32.mrb[0].mxu0
      %v2352 = vadd.f32 %v2191, %v2351
      %v2353 = vpop.f32.mrb[0].mxu0
      %v2354 = vpop.f32.mrb[0].mxu0
      %v2355 = vadd.f32 %v2194, %v2354
      %v2356 = vpop.f32.mrb[0].mxu0
      %2357 = vmatprep.mubr.bf16.mxu0 0
      %2358 = vmatmul.mubr.bf16.gmra.mrb[0].mxu0 %v767
      %v2359 = vpop.f32.mrb[0].mxu0
      %v2360 = vadd.f32 %v2199, %v2359
      %v2361 = vpop.f32.mrb[0].mxu0
      %v2362 = vpop.f32.mrb[0].mxu0
      %v2363 = vadd.f32 %v2202, %v2362
      %v2364 = vpop.f32.mrb[0].mxu0
      %2365 = vmatprep.mubr.bf16.mxu0 0
      %2366 = vmatmul.mubr.bf16.gmra.mrb[0].mxu0 %v768
      %v2367 = vpop.f32.mrb[0].mxu0
      %v2368 = vadd.f32 %v2207, %v2367
      %v2369 = vpop.f32.mrb[0].mxu0
      %v2370 = vpop.f32.mrb[0].mxu0
      %v2371 = vadd.f32 %v2210, %v2370
      %v2372 = vpop.f32.mrb[0].mxu0
      %2373 = vmatprep.mubr.bf16.mxu0 0
      %2374 = vmatmul.mubr.bf16.gmra.mrb[0].mxu0 %v769
      %v2375 = vpop.f32.mrb[0].mxu0
      %v2376 = vadd.f32 %v2215, %v2375
      %v2377 = vpop.f32.mrb[0].mxu0
      %v2378 = vpop.f32.mrb[0].mxu0
      %v2379 = vadd.f32 %v2218, %v2378
      %v2380 = vpop.f32.mrb[0].mxu0
      %2381 = vmatprep.mubr.bf16.mxu0 0
      %2382 = vmatmul.mubr.bf16.gmra.mrb[0].mxu0 %v770
      %v2383 = vpop.f32.mrb[0].mxu0
      %v2384 = vadd.f32 %v2223, %v2383
      %v2385 = vpop.f32.mrb[0].mxu0
      %v2386 = vpop.f32.mrb[0].mxu0
      %v2387 = vadd.f32 %v2226, %v2386
      %v2388 = vpop.f32.mrb[0].mxu0
      %2389 = vmatprep.mubr.bf16.mxu0 0
      %2390 = vmatmul.mubr.bf16.gmra.mrb[0].mxu0 %v771
      %v2391 = vpop.f32.mrb[0].mxu0
      %v2392 = vadd.f32 %v2231, %v2391
      %v2393 = vpop.f32.mrb[0].mxu0
      %v2394 = vpop.f32.mrb[0].mxu0
      %v2395 = vadd.f32 %v2234, %v2394
      %v2396 = vpop.f32.mrb[0].mxu0
      %2397 = vmatprep.mubr.bf16.mxu0 0
      %2398 = vmatmul.mubr.bf16.gmra.mrb[0].mxu0 %v772
      %v2399 = vpop.f32.mrb[0].mxu0
      %v2400 = vadd.f32 %v2239, %v2399
      %v2401 = vpop.f32.mrb[0].mxu0
      %v2402 = vpop.f32.mrb[0].mxu0
      %v2403 = vadd.f32 %v2242, %v2402
      %v2404 = vpop.f32.mrb[0].mxu0
      %2405 = vdwg.mxu0
      %v2406 = vadd.f32 %v1859, %v2280
      %v2407 = vadd.f32 %v1860, %v2283
      %v2408 = vadd.f32 %v1861, %v2288
      %v2409 = vadd.f32 %v1862, %v2291
      %v2410 = vadd.f32 %v1863, %v2296
      %v2411 = vadd.f32 %v1864, %v2299
      %v2412 = vadd.f32 %v1865, %v2304
      %v2413 = vadd.f32 %v1866, %v2307
      %v2414 = vadd.f32 %v1867, %v2312
      %v2415 = vadd.f32 %v1868, %v2315
      %v2416 = vadd.f32 %v1869, %v2320
      %v2417 = vadd.f32 %v1870, %v2323
      %v2418 = vadd.f32 %v1871, %v2328
      %v2419 = vadd.f32 %v1872, %v2331
      %v2420 = vadd.f32 %v1873, %v2336
      %v2421 = vadd.f32 %v1874, %v2339
      %v2422 = vadd.f32 %v1875, %v2344
      %v2423 = vadd.f32 %v1876, %v2347
      %v2424 = vadd.f32 %v1877, %v2352
      %v2425 = vadd.f32 %v1878, %v2355
      %v2426 = vadd.f32 %v1879, %v2360
      %v2427 = vadd.f32 %v1880, %v2363
      %v2428 = vadd.f32 %v1881, %v2368
      %v2429 = vadd.f32 %v1882, %v2371
      %v2430 = vadd.f32 %v1883, %v2376
      %v2431 = vadd.f32 %v1884, %v2379
      %v2432 = vadd.f32 %v1885, %v2384
      %v2433 = vadd.f32 %v1886, %v2387
      %v2434 = vadd.f32 %v1887, %v2392
      %v2435 = vadd.f32 %v1888, %v2395
      %v2436 = vadd.f32 %v1889, %v2400
      %v2437 = vadd.f32 %v1890, %v2403
      %vm2438 = vcmask 130048
      %2439 = vst.msk [vmem:[%s391] sm:$0xff] %vm2438, %v2406
      %2440 = vst.msk [vmem:[%s391 + $0x8] sm:$0xff] %vm2438, %v2407
      %2441 = vst.msk [vmem:[%s391 + $0x10] sm:$0xff] %vm2438, %v2408
      %2442 = vst.msk [vmem:[%s391 + $0x18] sm:$0xff] %vm2438, %v2409
      %2443 = vst.msk [vmem:[%s391 + $0x20] sm:$0xff] %vm2438, %v2410
      %2444 = vst.msk [vmem:[%s391 + $0x28] sm:$0xff] %vm2438, %v2411
      %2445 = vst.msk [vmem:[%s391 + $0x30] sm:$0xff] %vm2438, %v2412
      %2446 = vst.msk [vmem:[%s391 + $0x38] sm:$0xff] %vm2438, %v2413
      %2447 = vst.msk [vmem:[%s391 + $0x40] sm:$0xff] %vm2438, %v2414
      %2448 = vst.msk [vmem:[%s391 + $0x48] sm:$0xff] %vm2438, %v2415
      %2449 = vst.msk [vmem:[%s391 + $0x50] sm:$0xff] %vm2438, %v2416
      %2450 = vst.msk [vmem:[%s391 + $0x58] sm:$0xff] %vm2438, %v2417
      %2451 = vst.msk [vmem:[%s391 + $0x60] sm:$0xff] %vm2438, %v2418
      %2452 = vst.msk [vmem:[%s391 + $0x68] sm:$0xff] %vm2438, %v2419
      %2453 = vst.msk [vmem:[%s391 + $0x70] sm:$0xff] %vm2438, %v2420
      %2454 = vst.msk [vmem:[%s391 + $0x78] sm:$0xff] %vm2438, %v2421
      %2455 = vst.msk [vmem:[%s391 + $0x80] sm:$0xff] %vm2438, %v2422
      %2456 = vst.msk [vmem:[%s391 + $0x88] sm:$0xff] %vm2438, %v2423
      %2457 = vst.msk [vmem:[%s391 + $0x90] sm:$0xff] %vm2438, %v2424
      %2458 = vst.msk [vmem:[%s391 + $0x98] sm:$0xff] %vm2438, %v2425
      %2459 = vst.msk [vmem:[%s391 + $0xa0] sm:$0xff] %vm2438, %v2426
      %2460 = vst.msk [vmem:[%s391 + $0xa8] sm:$0xff] %vm2438, %v2427
      %2461 = vst.msk [vmem:[%s391 + $0xb0] sm:$0xff] %vm2438, %v2428
      %2462 = vst.msk [vmem:[%s391 + $0xb8] sm:$0xff] %vm2438, %v2429
      %2463 = vst.msk [vmem:[%s391 + $0xc0] sm:$0xff] %vm2438, %v2430
      %2464 = vst.msk [vmem:[%s391 + $0xc8] sm:$0xff] %vm2438, %v2431
      %2465 = vst.msk [vmem:[%s391 + $0xd0] sm:$0xff] %vm2438, %v2432
      %2466 = vst.msk [vmem:[%s391 + $0xd8] sm:$0xff] %vm2438, %v2433
      %2467 = vst.msk [vmem:[%s391 + $0xe0] sm:$0xff] %vm2438, %v2434
      %2468 = vst.msk [vmem:[%s391 + $0xe8] sm:$0xff] %vm2438, %v2435
      %2469 = vst.msk [vmem:[%s391 + $0xf0] sm:$0xff] %vm2438, %v2436
      %2470 = vst.msk [vmem:[%s391 + $0xf8] sm:$0xff] %vm2438, %v2437
      %s2471 = smul.u32 16, %s21
      %p2472 = scmp.lt.s32.totalorder %s20, 1
      %s2473 = scalar_select %p2472, %s20, 1
      %p2474 = scmp.lt.s32.totalorder %s2471, 15
      %s2475 = scalar_select %p2474, %s2471, 15
      %s2476 = smul.addr %s2475, 2
      %s2477 = smul.addr %s2473, 32
      %s2478 = sadd.s32 %s2476, %s2477
      %s2479 = smul.addr %s2478, 8
      %s2480 = scalar_lea.vmem %s5, %s2479
      // Predicated region
      $region41: #{grid_feature_transform.1} parent=39 // pred_check
        %p2481 = pneg %p190
      $region42: #{grid_feature_transform.1} parent=39 // pred_check_branch
        %2483 = sbr.rel (%p2481) target = $region44
      $region43: #{grid_feature_transform.1} parent=39 // pred_region
        %s2484 = smul.u32 16, %s21
      $region44: #{grid_feature_transform.1} parent=39 // pred_fallthru
        _
    $region40: #{grid_feature_transform.1} parent=5 // pred_fallthru
      _
    %p2485 = scmp.le.s32.totalorder 2, %s11
    // Predicated region
    $region45: #{grid_feature_transform.1} parent=5 // pred_check
      %p2486 = pneg %p2485
    $region46: #{grid_feature_transform.1} parent=5 // pred_check_branch
      %2488 = sbr.rel (%p2486) target = $region48
    $region47: #{grid_feature_transform.1} parent=5 // pred_region
      %s2489 = ssub.s32 %s11, 2
      // Predicated region
      $region49: #{grid_feature_transform.1} parent=47 // pred_check
        %p2490 = pneg %p196
      $region50: #{grid_feature_transform.1} parent=47 // pred_check_branch
        %2492 = sbr.rel (%p2490) target = $region52
      $region51: #{grid_feature_transform.1} parent=47 // pred_region
        %s2493 = smul.u32 16, %s23
        %p2494 = scmp.lt.s32.totalorder %s22, 1
        %s2495 = scalar_select %p2494, %s22, 1
        %p2496 = scmp.lt.s32.totalorder %s2493, 15
        %s2497 = scalar_select %p2496, %s2493, 15
        %s2498 = smul.addr %s2497, 2
        %s2499 = smul.addr %s2495, 32
        %s2500 = sadd.s32 %s2498, %s2499
        %s2501 = smul.addr %s2500, 8
        %s2502 = scalar_lea.vmem %s5, %s2501
      $region52: #{grid_feature_transform.1} parent=47 // pred_fallthru
        _
    $region48: #{grid_feature_transform.1} parent=5 // pred_fallthru
      _
  $region6: #{grid_feature_transform.1} parent=0 // loop_footer
    %s15 = sadd.s32 1, %s11
  $region7: #{grid_feature_transform.1} parent=0 // loop_footer_branch
    %10 = sbr.rel target = $region3
  $region8: #{grid_feature_transform.1} parent=0 // loop_exit
    _

</llo_original>
